<compile_context>
chip_gen: v7x
topology: tpu7x:2x2x1
jax: 0.10.0
libtpu: 0.0.40
codegen_flags: <defaults>
</compile_context>

<pallas_src>
import jax
import jax.numpy as jnp
from jax.experimental import pallas as pl
from jax.experimental.pallas import tpu as pltpu

_BN_EPS = 1e-5
_SLOPE = 0.2  # WGAN critics use LeakyReLU(0.2)


# ---------------------------------------------------------------------------
# Pallas kernels
# ---------------------------------------------------------------------------
def conv_block_kernel(p_ref, w_ref, shift_ref, o_ref):
    """Fused conv-as-GEMM block: (TM,K)@(K,Cout) + shift, LeakyReLU(0.2).

    The BN scale (gamma / sqrt(var+eps)) is folded into w ahead of time, so
    only the additive per-channel shift is applied here.
    """
    y = jnp.dot(p_ref[...], w_ref[...], preferred_element_type=jnp.float32)
    y = y + shift_ref[...]
    o_ref[...] = jnp.maximum(y, _SLOPE * y)  # LeakyReLU(0.2), single VPU op


def head_kernel(p_ref, w_ref, b_ref, o_ref):
    """Final Conv2d(8F -> 1, k4, s1, p0): VPU multiply + lane reduction + bias.

    Avoids a 1-output-column MXU matmul; bias is a scalar read from SMEM.
    No sigmoid — a WGAN critic outputs an unbounded score.
    """
    prod = p_ref[...] * w_ref[...]                      # (M, K) * (1, K)
    o_ref[...] = jnp.sum(prod, axis=-1, keepdims=True) + b_ref[0]


# ---------------------------------------------------------------------------
# pallas_call wrappers
# ---------------------------------------------------------------------------
def _choose_row_tile(m):
    for tm in (256, 128, 64, 32, 16, 8):
        if m % tm == 0:
            return tm
    return m  # fall back to a single full-extent block


def conv_block(patches, w_mat, shift):
    m, k = patches.shape
    cout = w_mat.shape[1]
    tm = _choose_row_tile(m)
    return pl.pallas_call(
        conv_block_kernel,
        out_shape=jax.ShapeDtypeStruct((m, cout), jnp.float32),
        grid_spec=pltpu.PrefetchScalarGridSpec(
            num_scalar_prefetch=0,
            grid=(m // tm,),
            in_specs=[
                pl.BlockSpec((tm, k), lambda i: (i, 0)),     # streamed row tiles
                pl.BlockSpec((k, cout), lambda i: (0, 0)),   # VMEM-resident weight
                pl.BlockSpec((1, cout), lambda i: (0, 0)),   # VMEM-resident shift
            ],
            out_specs=pl.BlockSpec((tm, cout), lambda i: (i, 0)),
        ),
        compiler_params=pltpu.CompilerParams(
            dimension_semantics=("parallel",)),  # shards across both TCs on v7x
    )(patches, w_mat, shift)


def critic_head(patches, w_row, bias):
    m, k = patches.shape
    return pl.pallas_call(
        head_kernel,
        out_shape=jax.ShapeDtypeStruct((m, 1), jnp.float32),
        grid_spec=pltpu.PrefetchScalarGridSpec(
            num_scalar_prefetch=0,
            grid=(1,),
            in_specs=[
                pl.BlockSpec((m, k), lambda i: (0, 0)),
                pl.BlockSpec((1, k), lambda i: (0, 0)),
                pl.BlockSpec(memory_space=pltpu.MemorySpace.SMEM),  # scalar bias
            ],
            out_specs=pl.BlockSpec((m, 1), lambda i: (0, 0)),
        ),
        compiler_params=pltpu.CompilerParams(
            dimension_semantics=("arbitrary",)),
    )(patches, w_row, bias)


# ---------------------------------------------------------------------------
# JAX-level layout plumbing (im2col, padding, parameter prep)
# ---------------------------------------------------------------------------
def _im2col(x_nhwc, ksize, stride, pad):
    """Extract conv patches -> (N*OH*OW, ksize*ksize*C), column order (kh,kw,c)."""
    n, h, w, c = x_nhwc.shape
    if pad:
        x_nhwc = jnp.pad(x_nhwc, ((0, 0), (pad, pad), (pad, pad), (0, 0)))
    oh = (h + 2 * pad - ksize) // stride + 1
    ow = (w + 2 * pad - ksize) // stride + 1
    taps = []
    for kh in range(ksize):
        for kw in range(ksize):
            win = jax.lax.slice(
                x_nhwc,
                (0, kh, kw, 0),
                (n, kh + stride * (oh - 1) + 1, kw + stride * (ow - 1) + 1, c),
                (1, stride, stride, 1))          # (N, OH, OW, C)
            taps.append(win)
    patches = jnp.stack(taps, axis=3)            # (N, OH, OW, 16, C)
    return patches.reshape(n * oh * ow, ksize * ksize * c), (n, oh, ow)


def _round_up(n, m):
    return ((n + m - 1) // m) * m


def _pad_axis(a, axis, target):
    extra = target - a.shape[axis]
    if extra <= 0:
        return a
    widths = [(0, 0)] * a.ndim
    widths[axis] = (0, extra)
    return jnp.pad(a, widths)


def prep_params(raw):
    """Fold BN into (scaled weight, shift); reshape PyTorch weights to GEMM layout."""
    blocks = []
    for blk in raw["blocks"]:
        w = blk["w"]                                              # (Cout, Cin, 4, 4)
        cout = w.shape[0]
        w_mat = jnp.transpose(w, (2, 3, 1, 0)).reshape(-1, cout)  # (16*Cin, Cout)
        if blk["bn"] is None:
            shift = jnp.zeros((1, cout), jnp.float32)
        else:
            g, b, m, v = blk["bn"]
            scale = (g / jnp.sqrt(v + _BN_EPS)).reshape(1, cout)
            shift = (b.reshape(1, cout) - m.reshape(1, cout) * scale)
            w_mat = w_mat * scale                                 # fold BN scale
        w_mat = _pad_axis(w_mat, 0, _round_up(w_mat.shape[0], 128))  # align K to 128
        blocks.append((w_mat, shift))
    hw = raw["head_w"]                                            # (1, Cin, 4, 4)
    w_row = jnp.transpose(hw, (2, 3, 1, 0)).reshape(1, -1)        # (1, 16*Cin)
    head_b = raw["head_b"].reshape(1).astype(jnp.float32)         # (1,) -> SMEM
    return blocks, (w_row, head_b)


def wgan_critic_forward(x_nchw, prepped):
    """Pallas forward: x (N, C, H, W) f32 -> critic scores (N, 1, 1, 1)."""
    blocks, (w_row, head_b) = prepped
    x = jnp.transpose(x_nchw, (0, 2, 3, 1))                       # NHWC, C on lanes
    for w_mat, shift in blocks:                                   # 4 strided conv blocks
        patches, (n, oh, ow) = _im2col(x, ksize=4, stride=2, pad=1)
        patches = _pad_axis(patches, 1, w_mat.shape[0])           # match padded K
        y = conv_block(patches, w_mat, shift)                     # (N*OH*OW, Cout)
        x = y.reshape(n, oh, ow, -1)
    patches, (n, oh, ow) = _im2col(x, ksize=4, stride=1, pad=0)   # (N, 16*8F)
    score = critic_head(patches, w_row, head_b)                   # (N, 1)
    return jnp.transpose(score.reshape(n, oh, ow, 1), (0, 3, 1, 2))


# ---------------------------------------------------------------------------
# Pure-JAX reference (XLA convs) for the correctness check
# ---------------------------------------------------------------------------
def reference_forward(x_nchw, raw):
    x = jnp.transpose(x_nchw, (0, 2, 3, 1))
    for blk in raw["blocks"]:
        w_hwio = jnp.transpose(blk["w"], (2, 3, 1, 0))
        x = jax.lax.conv_general_dilated(
            x, w_hwio, window_strides=(2, 2), padding=((1, 1), (1, 1)),
            dimension_numbers=("NHWC", "HWIO", "NHWC"),
            precision=jax.lax.Precision.HIGHEST)
        if blk["bn"] is not None:
            g, b, m, v = blk["bn"]
            scale = g / jnp.sqrt(v + _BN_EPS)
            x = x * scale + (b - m * scale)
        x = jnp.where(x > 0.0, x, _SLOPE * x)
    w_hwio = jnp.transpose(raw["head_w"], (2, 3, 1, 0))
    x = jax.lax.conv_general_dilated(
        x, w_hwio, window_strides=(1, 1), padding=((0, 0), (0, 0)),
        dimension_numbers=("NHWC", "HWIO", "NHWC"),
        precision=jax.lax.Precision.HIGHEST) + raw["head_b"]
    return jnp.transpose(x, (0, 3, 1, 2))


if __name__ == "__main__":
    key = jax.random.PRNGKey(0)
    kit = iter(jax.random.split(key, 24))

    # Smallest shapes consistent with the module: the final 4x4 VALID conv
    # needs a 4x4 feature map, i.e. a 64x64 input image.
    batch, in_features, out_features, img = 2, 3, 8, 64
    chans = [in_features, out_features, out_features * 2,
             out_features * 4, out_features * 8]                 # [3, 8, 16, 32, 64]

    blocks = []
    for li in range(4):
        cin, cout = chans[li], chans[li + 1]
        bound = 1.0 / (cin * 16) ** 0.5
        w = jax.random.uniform(next(kit), (cout, cin, 4, 4), jnp.float32,
                               -bound, bound)
        if li == 0:
            bn = None                                            # first block has no BN
        else:
            g = jax.random.uniform(next(kit), (cout,), jnp.float32, 0.5, 1.5)
            b = jax.random.uniform(next(kit), (cout,), jnp.float32, -0.1, 0.1)
            m = jax.random.uniform(next(kit), (cout,), jnp.float32, -0.1, 0.1)
            v = jax.random.uniform(next(kit), (cout,), jnp.float32, 0.5, 1.5)
            bn = (g, b, m, v)
        blocks.append({"w": w, "bn": bn})

    cin = chans[-1]
    bound = 1.0 / (cin * 16) ** 0.5
    head_w = jax.random.uniform(next(kit), (1, cin, 4, 4), jnp.float32, -bound, bound)
    head_b = jax.random.uniform(next(kit), (1,), jnp.float32, -bound, bound)
    raw = {"blocks": blocks, "head_w": head_w, "head_b": head_b}

    x = jax.random.normal(next(kit), (batch, in_features, img, img), jnp.float32)

    prepped = prep_params(raw)
    forward = jax.jit(wgan_critic_forward)
    out = jax.block_until_ready(forward(x, prepped))

    ref = jax.block_until_ready(reference_forward(x, raw))
    assert out.shape == (batch, 1, 1, 1), out.shape
    assert jnp.allclose(out, ref, atol=2e-4, rtol=2e-4), (out, ref)

    print("KERNEL_OK")
</pallas_src>

<mosaic_0001>
module attributes {stable_mosaic.version = 11 : i64} {
  func.func @conv_block_kernel(%arg0: i32, %arg1: memref<256x128xf32, #tpu.memory_space<vmem>>, %arg2: memref<128x8xf32, #tpu.memory_space<vmem>>, %arg3: memref<1x8xf32, #tpu.memory_space<vmem>>, %arg4: memref<256x8xf32, #tpu.memory_space<vmem>>) attributes {dimension_semantics = [#tpu.dimension_semantics<parallel>], iteration_bounds = array<i64: 8>, scalar_prefetch = 0 : i64, scratch_operands = 0 : i64, tpu.core_type = #tpu.core_type<tc>, window_params = [{transform_indices = @transform_0, window_bounds = array<i64: 256, 128>}, {pipeline_mode = #tpu.pipeline_mode<synchronous>, transform_indices = @transform_1, window_bounds = array<i64: 128, 8>}, {pipeline_mode = #tpu.pipeline_mode<synchronous>, transform_indices = @transform_2, window_bounds = array<i64: 1, 8>}, {transform_indices = @transform_3, window_bounds = array<i64: 256, 8>}]} {
    %c0 = arith.constant 0 : index
    %c0_0 = arith.constant 0 : index
    %0 = vector.load %arg1[%c0, %c0_0] : memref<256x128xf32, #tpu.memory_space<vmem>>, vector<256x128xf32>
    %c0_1 = arith.constant 0 : index
    %c0_2 = arith.constant 0 : index
    %1 = vector.load %arg2[%c0_1, %c0_2] : memref<128x8xf32, #tpu.memory_space<vmem>>, vector<128x8xf32>
    %cst = arith.constant dense<0.000000e+00> : vector<256x8xf32>
    %2 = tpu.matmul %0, %1, %cst {dimension_numbers = #tpu.dot_dimension_numbers<[1], [0], [0], [1], [0, 0, 1, 1], [], []>} : vector<256x128xf32>, vector<128x8xf32>, vector<256x8xf32> -> vector<256x8xf32>
    %c0_3 = arith.constant 0 : index
    %c0_4 = arith.constant 0 : index
    %3 = vector.load %arg3[%c0_3, %c0_4] : memref<1x8xf32, #tpu.memory_space<vmem>>, vector<1x8xf32>
    %4 = vector.broadcast %3 : vector<1x8xf32> to vector<256x8xf32>
    %5 = arith.addf %2, %4 : vector<256x8xf32>
    %cst_5 = arith.constant 2.000000e-01 : f32
    %6 = vector.broadcast %cst_5 : f32 to vector<256x8xf32>
    %7 = arith.mulf %6, %5 : vector<256x8xf32>
    %8 = arith.maximumf %5, %7 : vector<256x8xf32>
    %c0_6 = arith.constant 0 : index
    %c0_7 = arith.constant 0 : index
    %9 = vector.load %arg4[%c0_6, %c0_7] : memref<256x8xf32, #tpu.memory_space<vmem>>, vector<256x8xf32>
    tpu.vector_store %arg4[%c0_6, %c0_7], %8 {strides = array<i32>} : memref<256x8xf32, #tpu.memory_space<vmem>>, vector<256x8xf32>,
    return
  }
  func.func @transform_0(%arg0: i32) -> (i32, i32) {
    %c0_i32 = arith.constant 0 : i32
    %c0_i32_0 = arith.constant 0 : i32
    return %arg0, %c0_i32 : i32, i32
  }
  func.func @transform_1(%arg0: i32) -> (i32, i32) {
    %c0_i32 = arith.constant 0 : i32
    %c0_i32_0 = arith.constant 0 : i32
    %c0_i32_1 = arith.constant 0 : i32
    return %c0_i32, %c0_i32_0 : i32, i32
  }
  func.func @transform_2(%arg0: i32) -> (i32, i32) {
    %c0_i32 = arith.constant 0 : i32
    %c0_i32_0 = arith.constant 0 : i32
    %c0_i32_1 = arith.constant 0 : i32
    return %c0_i32, %c0_i32_0 : i32, i32
  }
  func.func @transform_3(%arg0: i32) -> (i32, i32) {
    %c0_i32 = arith.constant 0 : i32
    %c0_i32_0 = arith.constant 0 : i32
    return %arg0, %c0_i32 : i32, i32
  }
}

module attributes {stable_mosaic.version = 11 : i64} {
  func.func @conv_block_kernel(%arg0: i32, %arg1: memref<256x128xf32, #tpu.memory_space<vmem>>, %arg2: memref<128x16xf32, #tpu.memory_space<vmem>>, %arg3: memref<1x16xf32, #tpu.memory_space<vmem>>, %arg4: memref<256x16xf32, #tpu.memory_space<vmem>>) attributes {dimension_semantics = [#tpu.dimension_semantics<parallel>], iteration_bounds = array<i64: 2>, scalar_prefetch = 0 : i64, scratch_operands = 0 : i64, tpu.core_type = #tpu.core_type<tc>, window_params = [{transform_indices = @transform_0, window_bounds = array<i64: 256, 128>}, {pipeline_mode = #tpu.pipeline_mode<synchronous>, transform_indices = @transform_1, window_bounds = array<i64: 128, 16>}, {pipeline_mode = #tpu.pipeline_mode<synchronous>, transform_indices = @transform_2, window_bounds = array<i64: 1, 16>}, {transform_indices = @transform_3, window_bounds = array<i64: 256, 16>}]} {
    %c0 = arith.constant 0 : index
    %c0_0 = arith.constant 0 : index
    %0 = vector.load %arg1[%c0, %c0_0] : memref<256x128xf32, #tpu.memory_space<vmem>>, vector<256x128xf32>
    %c0_1 = arith.constant 0 : index
    %c0_2 = arith.constant 0 : index
    %1 = vector.load %arg2[%c0_1, %c0_2] : memref<128x16xf32, #tpu.memory_space<vmem>>, vector<128x16xf32>
    %cst = arith.constant dense<0.000000e+00> : vector<256x16xf32>
    %2 = tpu.matmul %0, %1, %cst {dimension_numbers = #tpu.dot_dimension_numbers<[1], [0], [0], [1], [0, 0, 1, 1], [], []>} : vector<256x128xf32>, vector<128x16xf32>, vector<256x16xf32> -> vector<256x16xf32>
    %c0_3 = arith.constant 0 : index
    %c0_4 = arith.constant 0 : index
    %3 = vector.load %arg3[%c0_3, %c0_4] : memref<1x16xf32, #tpu.memory_space<vmem>>, vector<1x16xf32>
    %4 = vector.broadcast %3 : vector<1x16xf32> to vector<256x16xf32>
    %5 = arith.addf %2, %4 : vector<256x16xf32>
    %cst_5 = arith.constant 2.000000e-01 : f32
    %6 = vector.broadcast %cst_5 : f32 to vector<256x16xf32>
    %7 = arith.mulf %6, %5 : vector<256x16xf32>
    %8 = arith.maximumf %5, %7 : vector<256x16xf32>
    %c0_6 = arith.constant 0 : index
    %c0_7 = arith.constant 0 : index
    %9 = vector.load %arg4[%c0_6, %c0_7] : memref<256x16xf32, #tpu.memory_space<vmem>>, vector<256x16xf32>
    tpu.vector_store %arg4[%c0_6, %c0_7], %8 {strides = array<i32>} : memref<256x16xf32, #tpu.memory_space<vmem>>, vector<256x16xf32>,
    return
  }
  func.func @transform_0(%arg0: i32) -> (i32, i32) {
    %c0_i32 = arith.constant 0 : i32
    %c0_i32_0 = arith.constant 0 : i32
    return %arg0, %c0_i32 : i32, i32
  }
  func.func @transform_1(%arg0: i32) -> (i32, i32) {
    %c0_i32 = arith.constant 0 : i32
    %c0_i32_0 = arith.constant 0 : i32
    %c0_i32_1 = arith.constant 0 : i32
    return %c0_i32, %c0_i32_0 : i32, i32
  }
  func.func @transform_2(%arg0: i32) -> (i32, i32) {
    %c0_i32 = arith.constant 0 : i32
    %c0_i32_0 = arith.constant 0 : i32
    %c0_i32_1 = arith.constant 0 : i32
    return %c0_i32, %c0_i32_0 : i32, i32
  }
  func.func @transform_3(%arg0: i32) -> (i32, i32) {
    %c0_i32 = arith.constant 0 : i32
    %c0_i32_0 = arith.constant 0 : i32
    return %arg0, %c0_i32 : i32, i32
  }
}

module attributes {stable_mosaic.version = 11 : i64} {
  func.func @conv_block_kernel(%arg0: i32, %arg1: memref<128x256xf32, #tpu.memory_space<vmem>>, %arg2: memref<256x32xf32, #tpu.memory_space<vmem>>, %arg3: memref<1x32xf32, #tpu.memory_space<vmem>>, %arg4: memref<128x32xf32, #tpu.memory_space<vmem>>) attributes {dimension_semantics = [#tpu.dimension_semantics<parallel>], iteration_bounds = array<i64: 1>, scalar_prefetch = 0 : i64, scratch_operands = 0 : i64, tpu.core_type = #tpu.core_type<tc>, window_params = [{transform_indices = @transform_0, window_bounds = array<i64: 128, 256>}, {pipeline_mode = #tpu.pipeline_mode<synchronous>, transform_indices = @transform_1, window_bounds = array<i64: 256, 32>}, {pipeline_mode = #tpu.pipeline_mode<synchronous>, transform_indices = @transform_2, window_bounds = array<i64: 1, 32>}, {transform_indices = @transform_3, window_bounds = array<i64: 128, 32>}]} {
    %c0 = arith.constant 0 : index
    %c0_0 = arith.constant 0 : index
    %0 = vector.load %arg1[%c0, %c0_0] : memref<128x256xf32, #tpu.memory_space<vmem>>, vector<128x256xf32>
    %c0_1 = arith.constant 0 : index
    %c0_2 = arith.constant 0 : index
    %1 = vector.load %arg2[%c0_1, %c0_2] : memref<256x32xf32, #tpu.memory_space<vmem>>, vector<256x32xf32>
    %cst = arith.constant dense<0.000000e+00> : vector<128x32xf32>
    %2 = tpu.matmul %0, %1, %cst {dimension_numbers = #tpu.dot_dimension_numbers<[1], [0], [0], [1], [0, 0, 1, 1], [], []>} : vector<128x256xf32>, vector<256x32xf32>, vector<128x32xf32> -> vector<128x32xf32>
    %c0_3 = arith.constant 0 : index
    %c0_4 = arith.constant 0 : index
    %3 = vector.load %arg3[%c0_3, %c0_4] : memref<1x32xf32, #tpu.memory_space<vmem>>, vector<1x32xf32>
    %4 = vector.broadcast %3 : vector<1x32xf32> to vector<128x32xf32>
    %5 = arith.addf %2, %4 : vector<128x32xf32>
    %cst_5 = arith.constant 2.000000e-01 : f32
    %6 = vector.broadcast %cst_5 : f32 to vector<128x32xf32>
    %7 = arith.mulf %6, %5 : vector<128x32xf32>
    %8 = arith.maximumf %5, %7 : vector<128x32xf32>
    %c0_6 = arith.constant 0 : index
    %c0_7 = arith.constant 0 : index
    %9 = vector.load %arg4[%c0_6, %c0_7] : memref<128x32xf32, #tpu.memory_space<vmem>>, vector<128x32xf32>
    tpu.vector_store %arg4[%c0_6, %c0_7], %8 {strides = array<i32>} : memref<128x32xf32, #tpu.memory_space<vmem>>, vector<128x32xf32>,
    return
  }
  func.func @transform_0(%arg0: i32) -> (i32, i32) {
    %c0_i32 = arith.constant 0 : i32
    %c0_i32_0 = arith.constant 0 : i32
    return %arg0, %c0_i32 : i32, i32
  }
  func.func @transform_1(%arg0: i32) -> (i32, i32) {
    %c0_i32 = arith.constant 0 : i32
    %c0_i32_0 = arith.constant 0 : i32
    %c0_i32_1 = arith.constant 0 : i32
    return %c0_i32, %c0_i32_0 : i32, i32
  }
  func.func @transform_2(%arg0: i32) -> (i32, i32) {
    %c0_i32 = arith.constant 0 : i32
    %c0_i32_0 = arith.constant 0 : i32
    %c0_i32_1 = arith.constant 0 : i32
    return %c0_i32, %c0_i32_0 : i32, i32
  }
  func.func @transform_3(%arg0: i32) -> (i32, i32) {
    %c0_i32 = arith.constant 0 : i32
    %c0_i32_0 = arith.constant 0 : i32
    return %arg0, %c0_i32 : i32, i32
  }
}

module attributes {stable_mosaic.version = 11 : i64} {
  func.func @conv_block_kernel(%arg0: i32, %arg1: memref<32x512xf32, #tpu.memory_space<vmem>>, %arg2: memref<512x64xf32, #tpu.memory_space<vmem>>, %arg3: memref<1x64xf32, #tpu.memory_space<vmem>>, %arg4: memref<32x64xf32, #tpu.memory_space<vmem>>) attributes {dimension_semantics = [#tpu.dimension_semantics<parallel>], iteration_bounds = array<i64: 1>, scalar_prefetch = 0 : i64, scratch_operands = 0 : i64, tpu.core_type = #tpu.core_type<tc>, window_params = [{transform_indices = @transform_0, window_bounds = array<i64: 32, 512>}, {pipeline_mode = #tpu.pipeline_mode<synchronous>, transform_indices = @transform_1, window_bounds = array<i64: 512, 64>}, {pipeline_mode = #tpu.pipeline_mode<synchronous>, transform_indices = @transform_2, window_bounds = array<i64: 1, 64>}, {transform_indices = @transform_3, window_bounds = array<i64: 32, 64>}]} {
    %c0 = arith.constant 0 : index
    %c0_0 = arith.constant 0 : index
    %0 = vector.load %arg1[%c0, %c0_0] : memref<32x512xf32, #tpu.memory_space<vmem>>, vector<32x512xf32>
    %c0_1 = arith.constant 0 : index
    %c0_2 = arith.constant 0 : index
    %1 = vector.load %arg2[%c0_1, %c0_2] : memref<512x64xf32, #tpu.memory_space<vmem>>, vector<512x64xf32>
    %cst = arith.constant dense<0.000000e+00> : vector<32x64xf32>
    %2 = tpu.matmul %0, %1, %cst {dimension_numbers = #tpu.dot_dimension_numbers<[1], [0], [0], [1], [0, 0, 1, 1], [], []>} : vector<32x512xf32>, vector<512x64xf32>, vector<32x64xf32> -> vector<32x64xf32>
    %c0_3 = arith.constant 0 : index
    %c0_4 = arith.constant 0 : index
    %3 = vector.load %arg3[%c0_3, %c0_4] : memref<1x64xf32, #tpu.memory_space<vmem>>, vector<1x64xf32>
    %4 = vector.broadcast %3 : vector<1x64xf32> to vector<32x64xf32>
    %5 = arith.addf %2, %4 : vector<32x64xf32>
    %cst_5 = arith.constant 2.000000e-01 : f32
    %6 = vector.broadcast %cst_5 : f32 to vector<32x64xf32>
    %7 = arith.mulf %6, %5 : vector<32x64xf32>
    %8 = arith.maximumf %5, %7 : vector<32x64xf32>
    %c0_6 = arith.constant 0 : index
    %c0_7 = arith.constant 0 : index
    %9 = vector.load %arg4[%c0_6, %c0_7] : memref<32x64xf32, #tpu.memory_space<vmem>>, vector<32x64xf32>
    tpu.vector_store %arg4[%c0_6, %c0_7], %8 {strides = array<i32>} : memref<32x64xf32, #tpu.memory_space<vmem>>, vector<32x64xf32>,
    return
  }
  func.func @transform_0(%arg0: i32) -> (i32, i32) {
    %c0_i32 = arith.constant 0 : i32
    %c0_i32_0 = arith.constant 0 : i32
    return %arg0, %c0_i32 : i32, i32
  }
  func.func @transform_1(%arg0: i32) -> (i32, i32) {
    %c0_i32 = arith.constant 0 : i32
    %c0_i32_0 = arith.constant 0 : i32
    %c0_i32_1 = arith.constant 0 : i32
    return %c0_i32, %c0_i32_0 : i32, i32
  }
  func.func @transform_2(%arg0: i32) -> (i32, i32) {
    %c0_i32 = arith.constant 0 : i32
    %c0_i32_0 = arith.constant 0 : i32
    %c0_i32_1 = arith.constant 0 : i32
    return %c0_i32, %c0_i32_0 : i32, i32
  }
  func.func @transform_3(%arg0: i32) -> (i32, i32) {
    %c0_i32 = arith.constant 0 : i32
    %c0_i32_0 = arith.constant 0 : i32
    return %arg0, %c0_i32 : i32, i32
  }
}

module attributes {stable_mosaic.version = 11 : i64} {
  func.func @head_kernel(%arg0: i32, %arg1: memref<2x1024xf32, #tpu.memory_space<vmem>>, %arg2: memref<1x1024xf32, #tpu.memory_space<vmem>>, %arg3: memref<1xf32, #tpu.memory_space<smem>>, %arg4: memref<2x1xf32, #tpu.memory_space<vmem>>) attributes {dimension_semantics = [#tpu.dimension_semantics<arbitrary>], iteration_bounds = array<i64: 1>, scalar_prefetch = 0 : i64, scratch_operands = 0 : i64, tpu.core_type = #tpu.core_type<tc>, window_params = [{pipeline_mode = #tpu.pipeline_mode<synchronous>, transform_indices = @transform_0, window_bounds = array<i64: 2, 1024>}, {pipeline_mode = #tpu.pipeline_mode<synchronous>, transform_indices = @transform_1, window_bounds = array<i64: 1, 1024>}, {transform_indices = @transform_2, window_bounds = array<i64: 1>}, {pipeline_mode = #tpu.pipeline_mode<synchronous>, transform_indices = @transform_3, window_bounds = array<i64: 2, 1>}]} {
    %c0 = arith.constant 0 : index
    %c0_0 = arith.constant 0 : index
    %0 = vector.load %arg1[%c0, %c0_0] : memref<2x1024xf32, #tpu.memory_space<vmem>>, vector<2x1024xf32>
    %c0_1 = arith.constant 0 : index
    %c0_2 = arith.constant 0 : index
    %1 = vector.load %arg2[%c0_1, %c0_2] : memref<1x1024xf32, #tpu.memory_space<vmem>>, vector<1x1024xf32>
    %2 = vector.broadcast %1 : vector<1x1024xf32> to vector<2x1024xf32>
    %3 = arith.mulf %0, %2 : vector<2x1024xf32>
    %cst = arith.constant dense<0.000000e+00> : vector<2xf32>
    %4 = vector.multi_reduction <add>, %3, %cst [1] : vector<2x1024xf32> to vector<2xf32>
    %5 = vector.shape_cast %4 : vector<2xf32> to vector<2x1xf32>
    %c0_3 = arith.constant 0 : index
    %6 = memref.load %arg3[%c0_3] : memref<1xf32, #tpu.memory_space<smem>>
    %7 = vector.broadcast %6 : f32 to vector<2x1xf32>
    %8 = arith.addf %5, %7 : vector<2x1xf32>
    %c0_4 = arith.constant 0 : index
    %c0_5 = arith.constant 0 : index
    %9 = vector.load %arg4[%c0_4, %c0_5] : memref<2x1xf32, #tpu.memory_space<vmem>>, vector<2x1xf32>
    tpu.vector_store %arg4[%c0_4, %c0_5], %8 {strides = array<i32>} : memref<2x1xf32, #tpu.memory_space<vmem>>, vector<2x1xf32>,
    return
  }
  func.func @transform_0(%arg0: i32) -> (i32, i32) {
    %c0_i32 = arith.constant 0 : i32
    %c0_i32_0 = arith.constant 0 : i32
    %c0_i32_1 = arith.constant 0 : i32
    return %c0_i32, %c0_i32_0 : i32, i32
  }
  func.func @transform_1(%arg0: i32) -> (i32, i32) {
    %c0_i32 = arith.constant 0 : i32
    %c0_i32_0 = arith.constant 0 : i32
    %c0_i32_1 = arith.constant 0 : i32
    return %c0_i32, %c0_i32_0 : i32, i32
  }
  func.func @transform_2(%arg0: i32) -> i32 {
    %c0_i32 = arith.constant 0 : i32
    %c0_i32_0 = arith.constant 0 : i32
    return %c0_i32 : i32
  }
  func.func @transform_3(%arg0: i32) -> (i32, i32) {
    %c0_i32 = arith.constant 0 : i32
    %c0_i32_0 = arith.constant 0 : i32
    %c0_i32_1 = arith.constant 0 : i32
    return %c0_i32, %c0_i32_0 : i32, i32
  }
}

</mosaic_0001>

<llo_original>
// kernel: wgan_critic_forward.5
$region0: #{wgan_critic_forward.5}
  #allocation0 [shape = 'u32[]', space=smem, size = 0x4, offset = 0x4, fixed_abs, tag = 'smem constant byte address 0x4 - core index']
  #allocation1 [shape = 'u32[144,128]{1,0:T(1,128)}', space=vmem, size = 0x12000, scoped, tag = 'internal scratch']
  %s0 = inlined_call_operand.vmem [shape: f32[2048,128], index: 0, kind: input, shape index: {}]
  %s1 = inlined_call_operand.vmem [shape: f32[128,8], index: 1, kind: input, shape index: {}]
  %s2 = inlined_call_operand.vmem [shape: f32[1,8], index: 2, kind: input, shape index: {}]
  %s3 = inlined_call_operand.vmem [shape: f32[2048,8], index: 3, kind: output, shape index: {}]
  %s4 = sld [smem:[#allocation0]]
  $region45: #{wgan_critic_forward.5} parent=0
    _
  %s6 = ssub.s32 1, %s4
  %s7 = scalar_select 0, %s6, %s4
  loop: start=0, step=1, limit=10
  $region2: #{wgan_critic_forward.5} parent=0 // loop_pre_header
    _
  $region3: #{wgan_critic_forward.5} parent=0 // loop_header
    %s9 = sphi 0, %s13
    %p10 = scmp.ge.s32.totalorder %s9, 10
    %s19 = sphi 0, %s21
    %s22 = sphi 0, %s19
    %s23 = sphi 0, %s22
    %s39 = sphi 0, %s23
    %s43 = sphi 0, %s43
    %s45 = sphi 0, %s43
    %s46 = sphi 0, %s45
    %s60 = sphi 0, %s46
    %s64 = sphi 0, %s64
    %s66 = sphi 0, %s64
    %s67 = sphi 0, %s66
    %s81 = sphi 0, %s67
    %s87 = sphi 0, %s89
    %s90 = sphi 0, %s87
    %s91 = sphi 0, %s90
    %s107 = sphi 0, %s91
  $region4: #{wgan_critic_forward.5} parent=0 // loop_header_branch
    %12 = sbr.rel (%p10) target = $region8
  $region5: #{wgan_critic_forward.5} parent=0 // loop_body
    %s14 = ssub.s32 %s9, 1
    %s15 = ssub.s32 %s9, 2
    %s16 = sadd.s32 %s9, 1
    %s17 = ssub.s32 %s9, %s16
    %p18 = scmp.eq.s32.totalorder %s17, 0
    %s20 = sadd.s32 %s19, 1
    %s21 = scalar_select %p18, %s19, %s20
    %p24 = pneg %p18
    %p25 = scmp.eq.s32.totalorder %s9, 7
    %p26 = por %p24, %p25
    %p27 = scmp.ne.s32.totalorder %s19, %s22
    %p28 = scmp.eq.s32.totalorder %s9, 0
    %p29 = por %p27, %p28
    %p30 = scmp.ne.s32.totalorder %s19, %s22
    %p31 = scmp.eq.s32.totalorder %s14, 7
    %p32 = por %p30, %p31
    %p33 = scmp.ne.s32.totalorder %s22, %s23
    %p34 = scmp.eq.s32.totalorder %s14, 0
    %p35 = por %p33, %p34
    %p36 = scmp.ne.s32.totalorder %s22, %s23
    %p37 = scmp.eq.s32.totalorder %s15, 7
    %p38 = por %p36, %p37
    %p40 = scmp.ne.s32.totalorder %s23, %s39
    %p41 = scmp.eq.s32.totalorder %s15, 0
    %p42 = por %p40, %p41
    %s44 = sadd.s32 %s43, 1
    %p47 = scmp.eq.s32.totalorder %s9, 7
    %p48 = scmp.ne.s32.totalorder %s43, %s45
    %p49 = scmp.eq.s32.totalorder %s9, 0
    %p50 = por %p48, %p49
    %p51 = scmp.ne.s32.totalorder %s43, %s45
    %p52 = scmp.eq.s32.totalorder %s14, 7
    %p53 = por %p51, %p52
    %p54 = scmp.ne.s32.totalorder %s45, %s46
    %p55 = scmp.eq.s32.totalorder %s14, 0
    %p56 = por %p54, %p55
    %p57 = scmp.ne.s32.totalorder %s45, %s46
    %p58 = scmp.eq.s32.totalorder %s15, 7
    %p59 = por %p57, %p58
    %p61 = scmp.ne.s32.totalorder %s46, %s60
    %p62 = scmp.eq.s32.totalorder %s15, 0
    %p63 = por %p61, %p62
    %s65 = sadd.s32 %s64, 1
    %p68 = scmp.eq.s32.totalorder %s9, 7
    %p69 = scmp.ne.s32.totalorder %s64, %s66
    %p70 = scmp.eq.s32.totalorder %s9, 0
    %p71 = por %p69, %p70
    %p72 = scmp.ne.s32.totalorder %s64, %s66
    %p73 = scmp.eq.s32.totalorder %s14, 7
    %p74 = por %p72, %p73
    %p75 = scmp.ne.s32.totalorder %s66, %s67
    %p76 = scmp.eq.s32.totalorder %s14, 0
    %p77 = por %p75, %p76
    %p78 = scmp.ne.s32.totalorder %s66, %s67
    %p79 = scmp.eq.s32.totalorder %s15, 7
    %p80 = por %p78, %p79
    %p82 = scmp.ne.s32.totalorder %s67, %s81
    %p83 = scmp.eq.s32.totalorder %s15, 0
    %p84 = por %p82, %p83
    %s85 = ssub.s32 %s9, %s16
    %p86 = scmp.eq.s32.totalorder %s85, 0
    %s88 = sadd.s32 %s87, 1
    %s89 = scalar_select %p86, %s87, %s88
    %p92 = pneg %p86
    %p93 = scmp.eq.s32.totalorder %s9, 7
    %p94 = por %p92, %p93
    %p95 = scmp.ne.s32.totalorder %s87, %s90
    %p96 = scmp.eq.s32.totalorder %s9, 0
    %p97 = por %p95, %p96
    %p98 = scmp.ne.s32.totalorder %s87, %s90
    %p99 = scmp.eq.s32.totalorder %s14, 7
    %p100 = por %p98, %p99
    %p101 = scmp.ne.s32.totalorder %s90, %s91
    %p102 = scmp.eq.s32.totalorder %s14, 0
    %p103 = por %p101, %p102
    %p104 = scmp.ne.s32.totalorder %s90, %s91
    %p105 = scmp.eq.s32.totalorder %s15, 7
    %p106 = por %p104, %p105
    %p108 = scmp.ne.s32.totalorder %s91, %s107
    %p109 = scmp.eq.s32.totalorder %s15, 0
    %p110 = por %p108, %p109
    %p111 = scmp.le.s32.totalorder 1, %s9
    %p112 = scmp.lt.s32.totalorder %s9, 9
    %p113 = pnand %p111, %p112
    %p114 = pneg %p113
    // Predicated region
    $region9: #{wgan_critic_forward.5} parent=5 // pred_check
      _
    $region10: #{wgan_critic_forward.5} parent=5 // pred_check_branch
      %116 = sbr.rel (%p113) target = $region12
    $region11: #{wgan_critic_forward.5} parent=5 // pred_region
      %s117 = ssub.s32 %s9, 1
      // Predicated region
      $region13: #{wgan_critic_forward.5} parent=11 // pred_check
        %p118 = pneg %p56
      $region14: #{wgan_critic_forward.5} parent=11 // pred_check_branch
        %120 = sbr.rel (%p118) target = $region16
      $region15: #{wgan_critic_forward.5} parent=11 // pred_region
        _
      $region16: #{wgan_critic_forward.5} parent=11 // pred_fallthru
        _
      // Predicated region
      $region17: #{wgan_critic_forward.5} parent=11 // pred_check
        %p121 = pneg %p77
      $region18: #{wgan_critic_forward.5} parent=11 // pred_check_branch
        %123 = sbr.rel (%p121) target = $region20
      $region19: #{wgan_critic_forward.5} parent=11 // pred_region
        _
      $region20: #{wgan_critic_forward.5} parent=11 // pred_fallthru
        _
    $region12: #{wgan_critic_forward.5} parent=5 // pred_fallthru
      _
    %p124 = scmp.lt.s32.totalorder %s9, 8
    // Predicated region
    $region21: #{wgan_critic_forward.5} parent=5 // pred_check
      %p125 = pneg %p124
    $region22: #{wgan_critic_forward.5} parent=5 // pred_check_branch
      %127 = sbr.rel (%p125) target = $region24
    $region23: #{wgan_critic_forward.5} parent=5 // pred_region
      // Predicated region
      $region25: #{wgan_critic_forward.5} parent=23 // pred_check
        %p128 = pneg %p29
      $region26: #{wgan_critic_forward.5} parent=23 // pred_check_branch
        %130 = sbr.rel (%p128) target = $region28
      $region27: #{wgan_critic_forward.5} parent=23 // pred_region
        %s131 = smul.u32 32, %s9
        %p132 = scmp.lt.s32.totalorder %s131, 255
        %s133 = scalar_select %p132, %s131, 255
        %s134 = smul.addr %s133, 8
        %s135 = scalar_lea.vmem %s0, %s134
        %s136 = smul.u32 32, %s9
      $region28: #{wgan_critic_forward.5} parent=23 // pred_fallthru
        _
    $region24: #{wgan_critic_forward.5} parent=5 // pred_fallthru
      _
    %p137 = scmp.le.s32.totalorder 1, %s9
    %p138 = scmp.lt.s32.totalorder %s9, 9
    %p139 = pnand %p137, %p138
    %p140 = pneg %p139
    // Predicated region
    $region29: #{wgan_critic_forward.5} parent=5 // pred_check
      _
    $region30: #{wgan_critic_forward.5} parent=5 // pred_check_branch
      %142 = sbr.rel (%p139) target = $region32
    $region31: #{wgan_critic_forward.5} parent=5 // pred_region
      %s143 = ssub.s32 %s9, 1
      %s144 = smul.u32 32, %s14
      %p145 = scmp.lt.s32.totalorder %s144, 255
      %s146 = scalar_select %p145, %s144, 255
      %s147 = smul.addr %s146, 8
      %s148 = scalar_lea.vmem %s0, %s147
      %p149 = pneg %p35
      %p150 = pneg %p32
      %p151 = pneg %p56
      %p152 = pneg %p53
      %p153 = pneg %p77
      %p154 = pneg %p74
      %p155 = pneg %p103
      %p156 = pneg %p100
      %s157 = smul.u32 32, %s14
      %p158 = scmp.lt.s32.totalorder %s157, 255
      %s159 = scalar_select %p158, %s157, 255
      %s160 = smul.addr %s159, 8
      %s161 = scalar_lea.vmem %s3, %s160
      %s162 = smul.u32 32, %s14
      %p163 = scmp.lt.s32.totalorder %s162, 255
      %s164 = scalar_select %p163, %s162, 255
      %s165 = smul.addr %s164, 8
      %s166 = scalar_lea.vmem %s0, %s165
      %s167 = smul.u32 32, %s14
      %s168 = smul.u32 32, %s14
      %p169 = scmp.lt.s32.totalorder %s168, 255
      %s170 = scalar_select %p169, %s168, 255
      %s171 = smul.addr %s170, 8
      %s172 = scalar_lea.vmem %s3, %s171
      %s173 = smul.u32 32, %s14
      %v174 = vld [vmem:[%s166] sm:$0xff]
      %v175 = vld [vmem:[%s166 + $0x8] sm:$0xff]
      %v176 = vld [vmem:[%s166 + $0x10] sm:$0xff]
      %v177 = vld [vmem:[%s166 + $0x18] sm:$0xff]
      %v178 = vld [vmem:[%s166 + $0x20] sm:$0xff]
      %v179 = vld [vmem:[%s166 + $0x28] sm:$0xff]
      %v180 = vld [vmem:[%s166 + $0x30] sm:$0xff]
      %v181 = vld [vmem:[%s166 + $0x38] sm:$0xff]
      %v182 = vld [vmem:[%s166 + $0x40] sm:$0xff]
      %v183 = vld [vmem:[%s166 + $0x48] sm:$0xff]
      %v184 = vld [vmem:[%s166 + $0x50] sm:$0xff]
      %v185 = vld [vmem:[%s166 + $0x58] sm:$0xff]
      %v186 = vld [vmem:[%s166 + $0x60] sm:$0xff]
      %v187 = vld [vmem:[%s166 + $0x68] sm:$0xff]
      %v188 = vld [vmem:[%s166 + $0x70] sm:$0xff]
      %v189 = vld [vmem:[%s166 + $0x78] sm:$0xff]
      %v190 = vld [vmem:[%s166 + $0x80] sm:$0xff]
      %v191 = vld [vmem:[%s166 + $0x88] sm:$0xff]
      %v192 = vld [vmem:[%s166 + $0x90] sm:$0xff]
      %v193 = vld [vmem:[%s166 + $0x98] sm:$0xff]
      %v194 = vld [vmem:[%s166 + $0xa0] sm:$0xff]
      %v195 = vld [vmem:[%s166 + $0xa8] sm:$0xff]
      %v196 = vld [vmem:[%s166 + $0xb0] sm:$0xff]
      %v197 = vld [vmem:[%s166 + $0xb8] sm:$0xff]
      %v198 = vld [vmem:[%s166 + $0xc0] sm:$0xff]
      %v199 = vld [vmem:[%s166 + $0xc8] sm:$0xff]
      %v200 = vld [vmem:[%s166 + $0xd0] sm:$0xff]
      %v201 = vld [vmem:[%s166 + $0xd8] sm:$0xff]
      %v202 = vld [vmem:[%s166 + $0xe0] sm:$0xff]
      %v203 = vld [vmem:[%s166 + $0xe8] sm:$0xff]
      %v204 = vld [vmem:[%s166 + $0xf0] sm:$0xff]
      %v205 = vld [vmem:[%s166 + $0xf8] sm:$0xff]
      %v206 = vld [vmem:[%s1] sm:$0xff]
      %v207 = vld [vmem:[%s1 + $0x8] sm:$0xff]
      %v208 = vld [vmem:[%s1 + $0x10] sm:$0xff]
      %v209 = vld [vmem:[%s1 + $0x18] sm:$0xff]
      %v210 = vld [vmem:[%s1 + $0x20] sm:$0xff]
      %v211 = vld [vmem:[%s1 + $0x28] sm:$0xff]
      %v212 = vld [vmem:[%s1 + $0x30] sm:$0xff]
      %v213 = vld [vmem:[%s1 + $0x38] sm:$0xff]
      %v214 = vld [vmem:[%s1 + $0x40] sm:$0xff]
      %v215 = vld [vmem:[%s1 + $0x48] sm:$0xff]
      %v216 = vld [vmem:[%s1 + $0x50] sm:$0xff]
      %v217 = vld [vmem:[%s1 + $0x58] sm:$0xff]
      %v218 = vld [vmem:[%s1 + $0x60] sm:$0xff]
      %v219 = vld [vmem:[%s1 + $0x68] sm:$0xff]
      %v220 = vld [vmem:[%s1 + $0x70] sm:$0xff]
      %v221 = vld [vmem:[%s1 + $0x78] sm:$0xff]
      %v222 = vld [vmem:[%s2] sm:$0x1]
      %v224 = vlaneseq
      %v225 = vshrl.u32 %v224, 7
      %v226 = vsub.s32 0, %v225
      %v227 = vrot.slane %v222, %v226
      %229 = vmatprep.subr.mxu0 0.0
      %230 = vmatpush1.msra.mxu0 %v206
      %231 = vmatprep.subr.mxu0 0.0
      %232 = vmatpush1.msra.mxu0 %v207
      %233 = vmatprep.subr.mxu0 0.0
      %234 = vmatpush1.msra.mxu0 %v208
      %235 = vmatprep.subr.mxu0 0.0
      %236 = vmatpush1.msra.mxu0 %v209
      %237 = vmatprep.subr.mxu0 0.0
      %238 = vmatpush1.msra.mxu0 %v210
      %239 = vmatprep.subr.mxu0 0.0
      %240 = vmatpush1.msra.mxu0 %v211
      %241 = vmatprep.subr.mxu0 0.0
      %242 = vmatpush1.msra.mxu0 %v212
      %243 = vmatprep.subr.mxu0 0.0
      %244 = vmatpush1.msra.mxu0 %v213
      %245 = vmatprep.subr.mxu0 0.0
      %246 = vmatpush1.msra.mxu0 %v214
      %247 = vmatprep.subr.mxu0 0.0
      %248 = vmatpush1.msra.mxu0 %v215
      %249 = vmatprep.subr.mxu0 0.0
      %250 = vmatpush1.msra.mxu0 %v216
      %251 = vmatprep.subr.mxu0 0.0
      %252 = vmatpush1.msra.mxu0 %v217
      %253 = vmatprep.subr.mxu0 0.0
      %254 = vmatpush1.msra.mxu0 %v218
      %255 = vmatprep.subr.mxu0 0.0
      %256 = vmatpush1.msra.mxu0 %v219
      %257 = vmatprep.subr.mxu0 0.0
      %258 = vmatpush1.msra.mxu0 %v220
      %259 = vmatprep.subr.mxu0 0.0
      %260 = vmatpush1.msra.mxu0 %v221
      %261 = vmatprep.subr.mxu0 0.0
      %262 = vmatpush1.msra.mxu0 0.0
      %263 = vmatprep.subr.mxu0 0.0
      %264 = vmatpush1.msra.mxu0 0.0
      %265 = vmatprep.subr.mxu0 0.0
      %266 = vmatpush1.msra.mxu0 0.0
      %267 = vmatprep.subr.mxu0 0.0
      %268 = vmatpush1.msra.mxu0 0.0
      %269 = vmatprep.subr.mxu0 0.0
      %270 = vmatpush1.msra.mxu0 0.0
      %271 = vmatprep.subr.mxu0 0.0
      %272 = vmatpush1.msra.mxu0 0.0
      %273 = vmatprep.subr.mxu0 0.0
      %274 = vmatpush1.msra.mxu0 0.0
      %275 = vmatprep.subr.mxu0 0.0
      %276 = vmatpush1.msra.mxu0 0.0
      %277 = vmatprep.subr.mxu0 0.0
      %278 = vmatpush1.msra.mxu0 0.0
      %279 = vmatprep.subr.mxu0 0.0
      %280 = vmatpush1.msra.mxu0 0.0
      %281 = vmatprep.subr.mxu0 0.0
      %282 = vmatpush1.msra.mxu0 0.0
      %283 = vmatprep.subr.mxu0 0.0
      %284 = vmatpush1.msra.mxu0 0.0
      %285 = vmatprep.subr.mxu0 0.0
      %286 = vmatpush1.msra.mxu0 0.0
      %287 = vmatprep.subr.mxu0 0.0
      %288 = vmatpush1.msra.mxu0 0.0
      %289 = vmatprep.subr.mxu0 0.0
      %290 = vmatpush1.msra.mxu0 0.0
      %291 = vmatprep.subr.mxu0 0.0
      %292 = vmatpush1.msra.mxu0 0.0
      %293 = vmatprep.mubr.f32.mxu0 0.0
      %294 = vmatmul.mubr.f32.gmra.mrb[0].mxu0 %v174
      %v295 = vpop.f32.mrb[0].mxu0
      %v296 = vadd.f32 %v227, %v295
      %v297 = vpop.f32.mrb[0].mxu0
      %298 = vmatprep.mubr.f32.mxu0 0.0
      %299 = vmatmul.mubr.f32.gmra.mrb[0].mxu0 %v175
      %v300 = vpop.f32.mrb[0].mxu0
      %v301 = vadd.f32 %v227, %v300
      %v302 = vpop.f32.mrb[0].mxu0
      %303 = vmatprep.mubr.f32.mxu0 0.0
      %304 = vmatmul.mubr.f32.gmra.mrb[0].mxu0 %v176
      %v305 = vpop.f32.mrb[0].mxu0
      %v306 = vadd.f32 %v227, %v305
      %v307 = vpop.f32.mrb[0].mxu0
      %308 = vmatprep.mubr.f32.mxu0 0.0
      %309 = vmatmul.mubr.f32.gmra.mrb[0].mxu0 %v177
      %v310 = vpop.f32.mrb[0].mxu0
      %v311 = vadd.f32 %v227, %v310
      %v312 = vpop.f32.mrb[0].mxu0
      %313 = vmatprep.mubr.f32.mxu0 0.0
      %314 = vmatmul.mubr.f32.gmra.mrb[0].mxu0 %v178
      %v315 = vpop.f32.mrb[0].mxu0
      %v316 = vadd.f32 %v227, %v315
      %v317 = vpop.f32.mrb[0].mxu0
      %318 = vmatprep.mubr.f32.mxu0 0.0
      %319 = vmatmul.mubr.f32.gmra.mrb[0].mxu0 %v179
      %v320 = vpop.f32.mrb[0].mxu0
      %v321 = vadd.f32 %v227, %v320
      %v322 = vpop.f32.mrb[0].mxu0
      %323 = vmatprep.mubr.f32.mxu0 0.0
      %324 = vmatmul.mubr.f32.gmra.mrb[0].mxu0 %v180
      %v325 = vpop.f32.mrb[0].mxu0
      %v326 = vadd.f32 %v227, %v325
      %v327 = vpop.f32.mrb[0].mxu0
      %328 = vmatprep.mubr.f32.mxu0 0.0
      %329 = vmatmul.mubr.f32.gmra.mrb[0].mxu0 %v181
      %v330 = vpop.f32.mrb[0].mxu0
      %v331 = vadd.f32 %v227, %v330
      %v332 = vpop.f32.mrb[0].mxu0
      %333 = vmatprep.mubr.f32.mxu0 0.0
      %334 = vmatmul.mubr.f32.gmra.mrb[0].mxu0 %v182
      %v335 = vpop.f32.mrb[0].mxu0
      %v336 = vadd.f32 %v227, %v335
      %v337 = vpop.f32.mrb[0].mxu0
      %338 = vmatprep.mubr.f32.mxu0 0.0
      %339 = vmatmul.mubr.f32.gmra.mrb[0].mxu0 %v183
      %v340 = vpop.f32.mrb[0].mxu0
      %v341 = vadd.f32 %v227, %v340
      %v342 = vpop.f32.mrb[0].mxu0
      %343 = vmatprep.mubr.f32.mxu0 0.0
      %344 = vmatmul.mubr.f32.gmra.mrb[0].mxu0 %v184
      %v345 = vpop.f32.mrb[0].mxu0
      %v346 = vadd.f32 %v227, %v345
      %v347 = vpop.f32.mrb[0].mxu0
      %348 = vmatprep.mubr.f32.mxu0 0.0
      %349 = vmatmul.mubr.f32.gmra.mrb[0].mxu0 %v185
      %v350 = vpop.f32.mrb[0].mxu0
      %v351 = vadd.f32 %v227, %v350
      %v352 = vpop.f32.mrb[0].mxu0
      %353 = vmatprep.mubr.f32.mxu0 0.0
      %354 = vmatmul.mubr.f32.gmra.mrb[0].mxu0 %v186
      %v355 = vpop.f32.mrb[0].mxu0
      %v356 = vadd.f32 %v227, %v355
      %v357 = vpop.f32.mrb[0].mxu0
      %358 = vmatprep.mubr.f32.mxu0 0.0
      %359 = vmatmul.mubr.f32.gmra.mrb[0].mxu0 %v187
      %v360 = vpop.f32.mrb[0].mxu0
      %v361 = vadd.f32 %v227, %v360
      %v362 = vpop.f32.mrb[0].mxu0
      %363 = vmatprep.mubr.f32.mxu0 0.0
      %364 = vmatmul.mubr.f32.gmra.mrb[0].mxu0 %v188
      %v365 = vpop.f32.mrb[0].mxu0
      %v366 = vadd.f32 %v227, %v365
      %v367 = vpop.f32.mrb[0].mxu0
      %368 = vmatprep.mubr.f32.mxu0 0.0
      %369 = vmatmul.mubr.f32.gmra.mrb[0].mxu0 %v189
      %v370 = vpop.f32.mrb[0].mxu0
      %v371 = vadd.f32 %v227, %v370
      %v372 = vpop.f32.mrb[0].mxu0
      %373 = vmatprep.mubr.f32.mxu0 0.0
      %374 = vmatmul.mubr.f32.gmra.mrb[0].mxu0 %v190
      %v375 = vpop.f32.mrb[0].mxu0
      %v376 = vadd.f32 %v227, %v375
      %v377 = vpop.f32.mrb[0].mxu0
      %378 = vmatprep.mubr.f32.mxu0 0.0
      %379 = vmatmul.mubr.f32.gmra.mrb[0].mxu0 %v191
      %v380 = vpop.f32.mrb[0].mxu0
      %v381 = vadd.f32 %v227, %v380
      %v382 = vpop.f32.mrb[0].mxu0
      %383 = vmatprep.mubr.f32.mxu0 0.0
      %384 = vmatmul.mubr.f32.gmra.mrb[0].mxu0 %v192
      %v385 = vpop.f32.mrb[0].mxu0
      %v386 = vadd.f32 %v227, %v385
      %v387 = vpop.f32.mrb[0].mxu0
      %388 = vmatprep.mubr.f32.mxu0 0.0
      %389 = vmatmul.mubr.f32.gmra.mrb[0].mxu0 %v193
      %v390 = vpop.f32.mrb[0].mxu0
      %v391 = vadd.f32 %v227, %v390
      %v392 = vpop.f32.mrb[0].mxu0
      %393 = vmatprep.mubr.f32.mxu0 0.0
      %394 = vmatmul.mubr.f32.gmra.mrb[0].mxu0 %v194
      %v395 = vpop.f32.mrb[0].mxu0
      %v396 = vadd.f32 %v227, %v395
      %v397 = vpop.f32.mrb[0].mxu0
      %398 = vmatprep.mubr.f32.mxu0 0.0
      %399 = vmatmul.mubr.f32.gmra.mrb[0].mxu0 %v195
      %v400 = vpop.f32.mrb[0].mxu0
      %v401 = vadd.f32 %v227, %v400
      %v402 = vpop.f32.mrb[0].mxu0
      %403 = vmatprep.mubr.f32.mxu0 0.0
      %404 = vmatmul.mubr.f32.gmra.mrb[0].mxu0 %v196
      %v405 = vpop.f32.mrb[0].mxu0
      %v406 = vadd.f32 %v227, %v405
      %v407 = vpop.f32.mrb[0].mxu0
      %408 = vmatprep.mubr.f32.mxu0 0.0
      %409 = vmatmul.mubr.f32.gmra.mrb[0].mxu0 %v197
      %v410 = vpop.f32.mrb[0].mxu0
      %v411 = vadd.f32 %v227, %v410
      %v412 = vpop.f32.mrb[0].mxu0
      %413 = vmatprep.mubr.f32.mxu0 0.0
      %414 = vmatmul.mubr.f32.gmra.mrb[0].mxu0 %v198
      %v415 = vpop.f32.mrb[0].mxu0
      %v416 = vadd.f32 %v227, %v415
      %v417 = vpop.f32.mrb[0].mxu0
      %418 = vmatprep.mubr.f32.mxu0 0.0
      %419 = vmatmul.mubr.f32.gmra.mrb[0].mxu0 %v199
      %v420 = vpop.f32.mrb[0].mxu0
      %v421 = vadd.f32 %v227, %v420
      %v422 = vpop.f32.mrb[0].mxu0
      %423 = vmatprep.mubr.f32.mxu0 0.0
      %424 = vmatmul.mubr.f32.gmra.mrb[0].mxu0 %v200
      %v425 = vpop.f32.mrb[0].mxu0
      %v426 = vadd.f32 %v227, %v425
      %v427 = vpop.f32.mrb[0].mxu0
      %428 = vmatprep.mubr.f32.mxu0 0.0
      %429 = vmatmul.mubr.f32.gmra.mrb[0].mxu0 %v201
      %v430 = vpop.f32.mrb[0].mxu0
      %v431 = vadd.f32 %v227, %v430
      %v432 = vpop.f32.mrb[0].mxu0
      %433 = vmatprep.mubr.f32.mxu0 0.0
      %434 = vmatmul.mubr.f32.gmra.mrb[0].mxu0 %v202
      %v435 = vpop.f32.mrb[0].mxu0
      %v436 = vadd.f32 %v227, %v435
      %v437 = vpop.f32.mrb[0].mxu0
      %438 = vmatprep.mubr.f32.mxu0 0.0
      %439 = vmatmul.mubr.f32.gmra.mrb[0].mxu0 %v203
      %v440 = vpop.f32.mrb[0].mxu0
      %v441 = vadd.f32 %v227, %v440
      %v442 = vpop.f32.mrb[0].mxu0
      %443 = vmatprep.mubr.f32.mxu0 0.0
      %444 = vmatmul.mubr.f32.gmra.mrb[0].mxu0 %v204
      %v445 = vpop.f32.mrb[0].mxu0
      %v446 = vadd.f32 %v227, %v445
      %v447 = vpop.f32.mrb[0].mxu0
      %448 = vmatprep.mubr.f32.mxu0 0.0
      %449 = vmatmul.mubr.f32.gmra.mrb[0].mxu0 %v205
      %v450 = vpop.f32.mrb[0].mxu0
      %v451 = vadd.f32 %v227, %v450
      %v452 = vpop.f32.mrb[0].mxu0
      %453 = vdwg.mxu0
      %v454 = vmul.f32 %v296, 0.2
      %v455 = vmul.f32 %v301, 0.2
      %v456 = vmul.f32 %v306, 0.2
      %v457 = vmul.f32 %v311, 0.2
      %v458 = vmul.f32 %v316, 0.2
      %v459 = vmul.f32 %v321, 0.2
      %v460 = vmul.f32 %v326, 0.2
      %v461 = vmul.f32 %v331, 0.2
      %v462 = vmul.f32 %v336, 0.2
      %v463 = vmul.f32 %v341, 0.2
      %v464 = vmul.f32 %v346, 0.2
      %v465 = vmul.f32 %v351, 0.2
      %v466 = vmul.f32 %v356, 0.2
      %v467 = vmul.f32 %v361, 0.2
      %v468 = vmul.f32 %v366, 0.2
      %v469 = vmul.f32 %v371, 0.2
      %v470 = vmul.f32 %v376, 0.2
      %v471 = vmul.f32 %v381, 0.2
      %v472 = vmul.f32 %v386, 0.2
      %v473 = vmul.f32 %v391, 0.2
      %v474 = vmul.f32 %v396, 0.2
      %v475 = vmul.f32 %v401, 0.2
      %v476 = vmul.f32 %v406, 0.2
      %v477 = vmul.f32 %v411, 0.2
      %v478 = vmul.f32 %v416, 0.2
      %v479 = vmul.f32 %v421, 0.2
      %v480 = vmul.f32 %v426, 0.2
      %v481 = vmul.f32 %v431, 0.2
      %v482 = vmul.f32 %v436, 0.2
      %v483 = vmul.f32 %v441, 0.2
      %v484 = vmul.f32 %v446, 0.2
      %v485 = vmul.f32 %v451, 0.2
      %v486 = vmax.f32 %v296, %v454
      %v487 = vmax.f32 %v301, %v455
      %v488 = vmax.f32 %v306, %v456
      %v489 = vmax.f32 %v311, %v457
      %v490 = vmax.f32 %v316, %v458
      %v491 = vmax.f32 %v321, %v459
      %v492 = vmax.f32 %v326, %v460
      %v493 = vmax.f32 %v331, %v461
      %v494 = vmax.f32 %v336, %v462
      %v495 = vmax.f32 %v341, %v463
      %v496 = vmax.f32 %v346, %v464
      %v497 = vmax.f32 %v351, %v465
      %v498 = vmax.f32 %v356, %v466
      %v499 = vmax.f32 %v361, %v467
      %v500 = vmax.f32 %v366, %v468
      %v501 = vmax.f32 %v371, %v469
      %v502 = vmax.f32 %v376, %v470
      %v503 = vmax.f32 %v381, %v471
      %v504 = vmax.f32 %v386, %v472
      %v505 = vmax.f32 %v391, %v473
      %v506 = vmax.f32 %v396, %v474
      %v507 = vmax.f32 %v401, %v475
      %v508 = vmax.f32 %v406, %v476
      %v509 = vmax.f32 %v411, %v477
      %v510 = vmax.f32 %v416, %v478
      %v511 = vmax.f32 %v421, %v479
      %v512 = vmax.f32 %v426, %v480
      %v513 = vmax.f32 %v431, %v481
      %v514 = vmax.f32 %v436, %v482
      %v515 = vmax.f32 %v441, %v483
      %v516 = vmax.f32 %v446, %v484
      %v517 = vmax.f32 %v451, %v485
      %vm518 = vcmask 64512
      %519 = vst.msk [vmem:[%s172] sm:$0xff] %vm518, %v486
      %520 = vst.msk [vmem:[%s172 + $0x8] sm:$0xff] %vm518, %v487
      %521 = vst.msk [vmem:[%s172 + $0x10] sm:$0xff] %vm518, %v488
      %522 = vst.msk [vmem:[%s172 + $0x18] sm:$0xff] %vm518, %v489
      %523 = vst.msk [vmem:[%s172 + $0x20] sm:$0xff] %vm518, %v490
      %524 = vst.msk [vmem:[%s172 + $0x28] sm:$0xff] %vm518, %v491
      %525 = vst.msk [vmem:[%s172 + $0x30] sm:$0xff] %vm518, %v492
      %526 = vst.msk [vmem:[%s172 + $0x38] sm:$0xff] %vm518, %v493
      %527 = vst.msk [vmem:[%s172 + $0x40] sm:$0xff] %vm518, %v494
      %528 = vst.msk [vmem:[%s172 + $0x48] sm:$0xff] %vm518, %v495
      %529 = vst.msk [vmem:[%s172 + $0x50] sm:$0xff] %vm518, %v496
      %530 = vst.msk [vmem:[%s172 + $0x58] sm:$0xff] %vm518, %v497
      %531 = vst.msk [vmem:[%s172 + $0x60] sm:$0xff] %vm518, %v498
      %532 = vst.msk [vmem:[%s172 + $0x68] sm:$0xff] %vm518, %v499
      %533 = vst.msk [vmem:[%s172 + $0x70] sm:$0xff] %vm518, %v500
      %534 = vst.msk [vmem:[%s172 + $0x78] sm:$0xff] %vm518, %v501
      %535 = vst.msk [vmem:[%s172 + $0x80] sm:$0xff] %vm518, %v502
      %536 = vst.msk [vmem:[%s172 + $0x88] sm:$0xff] %vm518, %v503
      %537 = vst.msk [vmem:[%s172 + $0x90] sm:$0xff] %vm518, %v504
      %538 = vst.msk [vmem:[%s172 + $0x98] sm:$0xff] %vm518, %v505
      %539 = vst.msk [vmem:[%s172 + $0xa0] sm:$0xff] %vm518, %v506
      %540 = vst.msk [vmem:[%s172 + $0xa8] sm:$0xff] %vm518, %v507
      %541 = vst.msk [vmem:[%s172 + $0xb0] sm:$0xff] %vm518, %v508
      %542 = vst.msk [vmem:[%s172 + $0xb8] sm:$0xff] %vm518, %v509
      %543 = vst.msk [vmem:[%s172 + $0xc0] sm:$0xff] %vm518, %v510
      %544 = vst.msk [vmem:[%s172 + $0xc8] sm:$0xff] %vm518, %v511
      %545 = vst.msk [vmem:[%s172 + $0xd0] sm:$0xff] %vm518, %v512
      %546 = vst.msk [vmem:[%s172 + $0xd8] sm:$0xff] %vm518, %v513
      %547 = vst.msk [vmem:[%s172 + $0xe0] sm:$0xff] %vm518, %v514
      %548 = vst.msk [vmem:[%s172 + $0xe8] sm:$0xff] %vm518, %v515
      %549 = vst.msk [vmem:[%s172 + $0xf0] sm:$0xff] %vm518, %v516
      %550 = vst.msk [vmem:[%s172 + $0xf8] sm:$0xff] %vm518, %v517
      %s551 = smul.u32 32, %s14
      %p552 = scmp.lt.s32.totalorder %s551, 255
      %s553 = scalar_select %p552, %s551, 255
      %s554 = smul.addr %s553, 8
      %s555 = scalar_lea.vmem %s3, %s554
      // Predicated region
      $region33: #{wgan_critic_forward.5} parent=31 // pred_check
        %p556 = pneg %p100
      $region34: #{wgan_critic_forward.5} parent=31 // pred_check_branch
        %558 = sbr.rel (%p556) target = $region36
      $region35: #{wgan_critic_forward.5} parent=31 // pred_region
        %s559 = smul.u32 32, %s14
      $region36: #{wgan_critic_forward.5} parent=31 // pred_fallthru
        _
    $region32: #{wgan_critic_forward.5} parent=5 // pred_fallthru
      _
    %p560 = scmp.le.s32.totalorder 2, %s9
    // Predicated region
    $region37: #{wgan_critic_forward.5} parent=5 // pred_check
      %p561 = pneg %p560
    $region38: #{wgan_critic_forward.5} parent=5 // pred_check_branch
      %563 = sbr.rel (%p561) target = $region40
    $region39: #{wgan_critic_forward.5} parent=5 // pred_region
      %s564 = ssub.s32 %s9, 2
      // Predicated region
      $region41: #{wgan_critic_forward.5} parent=39 // pred_check
        %p565 = pneg %p106
      $region42: #{wgan_critic_forward.5} parent=39 // pred_check_branch
        %567 = sbr.rel (%p565) target = $region44
      $region43: #{wgan_critic_forward.5} parent=39 // pred_region
        %s568 = smul.u32 32, %s15
        %p569 = scmp.lt.s32.totalorder %s568, 255
        %s570 = scalar_select %p569, %s568, 255
        %s571 = smul.addr %s570, 8
        %s572 = scalar_lea.vmem %s3, %s571
      $region44: #{wgan_critic_forward.5} parent=39 // pred_fallthru
        _
    $region40: #{wgan_critic_forward.5} parent=5 // pred_fallthru
      _
  $region6: #{wgan_critic_forward.5} parent=0 // loop_footer
    %s13 = sadd.s32 1, %s9
  $region7: #{wgan_critic_forward.5} parent=0 // loop_footer_branch
    %8 = sbr.rel target = $region3
  $region8: #{wgan_critic_forward.5} parent=0 // loop_exit
    _

// kernel: wgan_critic_forward.6
$region0: #{wgan_critic_forward.6}
  #allocation0 [shape = 'u32[]', space=smem, size = 0x4, offset = 0x4, fixed_abs, tag = 'smem constant byte address 0x4 - core index']
  #allocation1 [shape = 'u32[144,128]{1,0:T(1,128)}', space=vmem, size = 0x12000, scoped, tag = 'internal scratch']
  %s0 = inlined_call_operand.vmem [shape: f32[512,128], index: 0, kind: input, shape index: {}]
  %s1 = inlined_call_operand.vmem [shape: f32[128,16], index: 1, kind: input, shape index: {}]
  %s2 = inlined_call_operand.vmem [shape: f32[1,16], index: 2, kind: input, shape index: {}]
  %s3 = inlined_call_operand.vmem [shape: f32[512,16], index: 3, kind: output, shape index: {}]
  %s4 = sld [smem:[#allocation0]]
  $region45: #{wgan_critic_forward.6} parent=0
    _
  %s6 = ssub.s32 1, %s4
  %s7 = scalar_select 0, %s6, %s4
  loop: start=0, step=1, limit=4
  $region2: #{wgan_critic_forward.6} parent=0 // loop_pre_header
    _
  $region3: #{wgan_critic_forward.6} parent=0 // loop_header
    %s9 = sphi 0, %s13
    %p10 = scmp.ge.s32.totalorder %s9, 4
    %s19 = sphi 0, %s21
    %s22 = sphi 0, %s19
    %s23 = sphi 0, %s22
    %s39 = sphi 0, %s23
    %s43 = sphi 0, %s43
    %s45 = sphi 0, %s43
    %s46 = sphi 0, %s45
    %s60 = sphi 0, %s46
    %s64 = sphi 0, %s64
    %s66 = sphi 0, %s64
    %s67 = sphi 0, %s66
    %s81 = sphi 0, %s67
    %s87 = sphi 0, %s89
    %s90 = sphi 0, %s87
    %s91 = sphi 0, %s90
    %s107 = sphi 0, %s91
  $region4: #{wgan_critic_forward.6} parent=0 // loop_header_branch
    %12 = sbr.rel (%p10) target = $region8
  $region5: #{wgan_critic_forward.6} parent=0 // loop_body
    %s14 = ssub.s32 %s9, 1
    %s15 = ssub.s32 %s9, 2
    %s16 = sadd.s32 %s9, 1
    %s17 = ssub.s32 %s9, %s16
    %p18 = scmp.eq.s32.totalorder %s17, 0
    %s20 = sadd.s32 %s19, 1
    %s21 = scalar_select %p18, %s19, %s20
    %p24 = pneg %p18
    %p25 = scmp.eq.s32.totalorder %s9, 1
    %p26 = por %p24, %p25
    %p27 = scmp.ne.s32.totalorder %s19, %s22
    %p28 = scmp.eq.s32.totalorder %s9, 0
    %p29 = por %p27, %p28
    %p30 = scmp.ne.s32.totalorder %s19, %s22
    %p31 = scmp.eq.s32.totalorder %s14, 1
    %p32 = por %p30, %p31
    %p33 = scmp.ne.s32.totalorder %s22, %s23
    %p34 = scmp.eq.s32.totalorder %s14, 0
    %p35 = por %p33, %p34
    %p36 = scmp.ne.s32.totalorder %s22, %s23
    %p37 = scmp.eq.s32.totalorder %s15, 1
    %p38 = por %p36, %p37
    %p40 = scmp.ne.s32.totalorder %s23, %s39
    %p41 = scmp.eq.s32.totalorder %s15, 0
    %p42 = por %p40, %p41
    %s44 = sadd.s32 %s43, 1
    %p47 = scmp.eq.s32.totalorder %s9, 1
    %p48 = scmp.ne.s32.totalorder %s43, %s45
    %p49 = scmp.eq.s32.totalorder %s9, 0
    %p50 = por %p48, %p49
    %p51 = scmp.ne.s32.totalorder %s43, %s45
    %p52 = scmp.eq.s32.totalorder %s14, 1
    %p53 = por %p51, %p52
    %p54 = scmp.ne.s32.totalorder %s45, %s46
    %p55 = scmp.eq.s32.totalorder %s14, 0
    %p56 = por %p54, %p55
    %p57 = scmp.ne.s32.totalorder %s45, %s46
    %p58 = scmp.eq.s32.totalorder %s15, 1
    %p59 = por %p57, %p58
    %p61 = scmp.ne.s32.totalorder %s46, %s60
    %p62 = scmp.eq.s32.totalorder %s15, 0
    %p63 = por %p61, %p62
    %s65 = sadd.s32 %s64, 1
    %p68 = scmp.eq.s32.totalorder %s9, 1
    %p69 = scmp.ne.s32.totalorder %s64, %s66
    %p70 = scmp.eq.s32.totalorder %s9, 0
    %p71 = por %p69, %p70
    %p72 = scmp.ne.s32.totalorder %s64, %s66
    %p73 = scmp.eq.s32.totalorder %s14, 1
    %p74 = por %p72, %p73
    %p75 = scmp.ne.s32.totalorder %s66, %s67
    %p76 = scmp.eq.s32.totalorder %s14, 0
    %p77 = por %p75, %p76
    %p78 = scmp.ne.s32.totalorder %s66, %s67
    %p79 = scmp.eq.s32.totalorder %s15, 1
    %p80 = por %p78, %p79
    %p82 = scmp.ne.s32.totalorder %s67, %s81
    %p83 = scmp.eq.s32.totalorder %s15, 0
    %p84 = por %p82, %p83
    %s85 = ssub.s32 %s9, %s16
    %p86 = scmp.eq.s32.totalorder %s85, 0
    %s88 = sadd.s32 %s87, 1
    %s89 = scalar_select %p86, %s87, %s88
    %p92 = pneg %p86
    %p93 = scmp.eq.s32.totalorder %s9, 1
    %p94 = por %p92, %p93
    %p95 = scmp.ne.s32.totalorder %s87, %s90
    %p96 = scmp.eq.s32.totalorder %s9, 0
    %p97 = por %p95, %p96
    %p98 = scmp.ne.s32.totalorder %s87, %s90
    %p99 = scmp.eq.s32.totalorder %s14, 1
    %p100 = por %p98, %p99
    %p101 = scmp.ne.s32.totalorder %s90, %s91
    %p102 = scmp.eq.s32.totalorder %s14, 0
    %p103 = por %p101, %p102
    %p104 = scmp.ne.s32.totalorder %s90, %s91
    %p105 = scmp.eq.s32.totalorder %s15, 1
    %p106 = por %p104, %p105
    %p108 = scmp.ne.s32.totalorder %s91, %s107
    %p109 = scmp.eq.s32.totalorder %s15, 0
    %p110 = por %p108, %p109
    %p111 = scmp.le.s32.totalorder 1, %s9
    %p112 = scmp.lt.s32.totalorder %s9, 3
    %p113 = pnand %p111, %p112
    %p114 = pneg %p113
    // Predicated region
    $region9: #{wgan_critic_forward.6} parent=5 // pred_check
      _
    $region10: #{wgan_critic_forward.6} parent=5 // pred_check_branch
      %116 = sbr.rel (%p113) target = $region12
    $region11: #{wgan_critic_forward.6} parent=5 // pred_region
      %s117 = ssub.s32 %s9, 1
      // Predicated region
      $region13: #{wgan_critic_forward.6} parent=11 // pred_check
        %p118 = pneg %p56
      $region14: #{wgan_critic_forward.6} parent=11 // pred_check_branch
        %120 = sbr.rel (%p118) target = $region16
      $region15: #{wgan_critic_forward.6} parent=11 // pred_region
        _
      $region16: #{wgan_critic_forward.6} parent=11 // pred_fallthru
        _
      // Predicated region
      $region17: #{wgan_critic_forward.6} parent=11 // pred_check
        %p121 = pneg %p77
      $region18: #{wgan_critic_forward.6} parent=11 // pred_check_branch
        %123 = sbr.rel (%p121) target = $region20
      $region19: #{wgan_critic_forward.6} parent=11 // pred_region
        _
      $region20: #{wgan_critic_forward.6} parent=11 // pred_fallthru
        _
    $region12: #{wgan_critic_forward.6} parent=5 // pred_fallthru
      _
    %p124 = scmp.lt.s32.totalorder %s9, 2
    // Predicated region
    $region21: #{wgan_critic_forward.6} parent=5 // pred_check
      %p125 = pneg %p124
    $region22: #{wgan_critic_forward.6} parent=5 // pred_check_branch
      %127 = sbr.rel (%p125) target = $region24
    $region23: #{wgan_critic_forward.6} parent=5 // pred_region
      // Predicated region
      $region25: #{wgan_critic_forward.6} parent=23 // pred_check
        %p128 = pneg %p29
      $region26: #{wgan_critic_forward.6} parent=23 // pred_check_branch
        %130 = sbr.rel (%p128) target = $region28
      $region27: #{wgan_critic_forward.6} parent=23 // pred_region
        %s131 = smul.u32 32, %s9
        %p132 = scmp.lt.s32.totalorder %s131, 63
        %s133 = scalar_select %p132, %s131, 63
        %s134 = smul.addr %s133, 8
        %s135 = scalar_lea.vmem %s0, %s134
        %s136 = smul.u32 32, %s9
      $region28: #{wgan_critic_forward.6} parent=23 // pred_fallthru
        _
    $region24: #{wgan_critic_forward.6} parent=5 // pred_fallthru
      _
    %p137 = scmp.le.s32.totalorder 1, %s9
    %p138 = scmp.lt.s32.totalorder %s9, 3
    %p139 = pnand %p137, %p138
    %p140 = pneg %p139
    // Predicated region
    $region29: #{wgan_critic_forward.6} parent=5 // pred_check
      _
    $region30: #{wgan_critic_forward.6} parent=5 // pred_check_branch
      %142 = sbr.rel (%p139) target = $region32
    $region31: #{wgan_critic_forward.6} parent=5 // pred_region
      %s143 = ssub.s32 %s9, 1
      %s144 = smul.u32 32, %s14
      %p145 = scmp.lt.s32.totalorder %s144, 63
      %s146 = scalar_select %p145, %s144, 63
      %s147 = smul.addr %s146, 8
      %s148 = scalar_lea.vmem %s0, %s147
      %p149 = pneg %p35
      %p150 = pneg %p32
      %p151 = pneg %p56
      %p152 = pneg %p53
      %p153 = pneg %p77
      %p154 = pneg %p74
      %p155 = pneg %p103
      %p156 = pneg %p100
      %s157 = smul.u32 32, %s14
      %p158 = scmp.lt.s32.totalorder %s157, 63
      %s159 = scalar_select %p158, %s157, 63
      %s160 = smul.addr %s159, 8
      %s161 = scalar_lea.vmem %s3, %s160
      %s162 = smul.u32 32, %s14
      %p163 = scmp.lt.s32.totalorder %s162, 63
      %s164 = scalar_select %p163, %s162, 63
      %s165 = smul.addr %s164, 8
      %s166 = scalar_lea.vmem %s0, %s165
      %s167 = smul.u32 32, %s14
      %s168 = smul.u32 32, %s14
      %p169 = scmp.lt.s32.totalorder %s168, 63
      %s170 = scalar_select %p169, %s168, 63
      %s171 = smul.addr %s170, 8
      %s172 = scalar_lea.vmem %s3, %s171
      %s173 = smul.u32 32, %s14
      %v174 = vld [vmem:[%s166] sm:$0xff]
      %v175 = vld [vmem:[%s166 + $0x8] sm:$0xff]
      %v176 = vld [vmem:[%s166 + $0x10] sm:$0xff]
      %v177 = vld [vmem:[%s166 + $0x18] sm:$0xff]
      %v178 = vld [vmem:[%s166 + $0x20] sm:$0xff]
      %v179 = vld [vmem:[%s166 + $0x28] sm:$0xff]
      %v180 = vld [vmem:[%s166 + $0x30] sm:$0xff]
      %v181 = vld [vmem:[%s166 + $0x38] sm:$0xff]
      %v182 = vld [vmem:[%s166 + $0x40] sm:$0xff]
      %v183 = vld [vmem:[%s166 + $0x48] sm:$0xff]
      %v184 = vld [vmem:[%s166 + $0x50] sm:$0xff]
      %v185 = vld [vmem:[%s166 + $0x58] sm:$0xff]
      %v186 = vld [vmem:[%s166 + $0x60] sm:$0xff]
      %v187 = vld [vmem:[%s166 + $0x68] sm:$0xff]
      %v188 = vld [vmem:[%s166 + $0x70] sm:$0xff]
      %v189 = vld [vmem:[%s166 + $0x78] sm:$0xff]
      %v190 = vld [vmem:[%s166 + $0x80] sm:$0xff]
      %v191 = vld [vmem:[%s166 + $0x88] sm:$0xff]
      %v192 = vld [vmem:[%s166 + $0x90] sm:$0xff]
      %v193 = vld [vmem:[%s166 + $0x98] sm:$0xff]
      %v194 = vld [vmem:[%s166 + $0xa0] sm:$0xff]
      %v195 = vld [vmem:[%s166 + $0xa8] sm:$0xff]
      %v196 = vld [vmem:[%s166 + $0xb0] sm:$0xff]
      %v197 = vld [vmem:[%s166 + $0xb8] sm:$0xff]
      %v198 = vld [vmem:[%s166 + $0xc0] sm:$0xff]
      %v199 = vld [vmem:[%s166 + $0xc8] sm:$0xff]
      %v200 = vld [vmem:[%s166 + $0xd0] sm:$0xff]
      %v201 = vld [vmem:[%s166 + $0xd8] sm:$0xff]
      %v202 = vld [vmem:[%s166 + $0xe0] sm:$0xff]
      %v203 = vld [vmem:[%s166 + $0xe8] sm:$0xff]
      %v204 = vld [vmem:[%s166 + $0xf0] sm:$0xff]
      %v205 = vld [vmem:[%s166 + $0xf8] sm:$0xff]
      %v206 = vld [vmem:[%s1] sm:$0xff]
      %v207 = vld [vmem:[%s1 + $0x8] sm:$0xff]
      %v208 = vld [vmem:[%s1 + $0x10] sm:$0xff]
      %v209 = vld [vmem:[%s1 + $0x18] sm:$0xff]
      %v210 = vld [vmem:[%s1 + $0x20] sm:$0xff]
      %v211 = vld [vmem:[%s1 + $0x28] sm:$0xff]
      %v212 = vld [vmem:[%s1 + $0x30] sm:$0xff]
      %v213 = vld [vmem:[%s1 + $0x38] sm:$0xff]
      %v214 = vld [vmem:[%s1 + $0x40] sm:$0xff]
      %v215 = vld [vmem:[%s1 + $0x48] sm:$0xff]
      %v216 = vld [vmem:[%s1 + $0x50] sm:$0xff]
      %v217 = vld [vmem:[%s1 + $0x58] sm:$0xff]
      %v218 = vld [vmem:[%s1 + $0x60] sm:$0xff]
      %v219 = vld [vmem:[%s1 + $0x68] sm:$0xff]
      %v220 = vld [vmem:[%s1 + $0x70] sm:$0xff]
      %v221 = vld [vmem:[%s1 + $0x78] sm:$0xff]
      %v222 = vld [vmem:[%s2] sm:$0x1]
      %v224 = vlaneseq
      %v225 = vshrl.u32 %v224, 7
      %v226 = vsub.s32 0, %v225
      %v227 = vrot.slane %v222, %v226
      %229 = vmatprep.subr.mxu0 0.0
      %230 = vmatpush1.msra.mxu0 %v206
      %231 = vmatprep.subr.mxu0 0.0
      %232 = vmatpush1.msra.mxu0 %v207
      %233 = vmatprep.subr.mxu0 0.0
      %234 = vmatpush1.msra.mxu0 %v208
      %235 = vmatprep.subr.mxu0 0.0
      %236 = vmatpush1.msra.mxu0 %v209
      %237 = vmatprep.subr.mxu0 0.0
      %238 = vmatpush1.msra.mxu0 %v210
      %239 = vmatprep.subr.mxu0 0.0
      %240 = vmatpush1.msra.mxu0 %v211
      %241 = vmatprep.subr.mxu0 0.0
      %242 = vmatpush1.msra.mxu0 %v212
      %243 = vmatprep.subr.mxu0 0.0
      %244 = vmatpush1.msra.mxu0 %v213
      %245 = vmatprep.subr.mxu0 0.0
      %246 = vmatpush1.msra.mxu0 %v214
      %247 = vmatprep.subr.mxu0 0.0
      %248 = vmatpush1.msra.mxu0 %v215
      %249 = vmatprep.subr.mxu0 0.0
      %250 = vmatpush1.msra.mxu0 %v216
      %251 = vmatprep.subr.mxu0 0.0
      %252 = vmatpush1.msra.mxu0 %v217
      %253 = vmatprep.subr.mxu0 0.0
      %254 = vmatpush1.msra.mxu0 %v218
      %255 = vmatprep.subr.mxu0 0.0
      %256 = vmatpush1.msra.mxu0 %v219
      %257 = vmatprep.subr.mxu0 0.0
      %258 = vmatpush1.msra.mxu0 %v220
      %259 = vmatprep.subr.mxu0 0.0
      %260 = vmatpush1.msra.mxu0 %v221
      %261 = vmatprep.subr.mxu0 0.0
      %262 = vmatpush1.msra.mxu0 0.0
      %263 = vmatprep.subr.mxu0 0.0
      %264 = vmatpush1.msra.mxu0 0.0
      %265 = vmatprep.subr.mxu0 0.0
      %266 = vmatpush1.msra.mxu0 0.0
      %267 = vmatprep.subr.mxu0 0.0
      %268 = vmatpush1.msra.mxu0 0.0
      %269 = vmatprep.subr.mxu0 0.0
      %270 = vmatpush1.msra.mxu0 0.0
      %271 = vmatprep.subr.mxu0 0.0
      %272 = vmatpush1.msra.mxu0 0.0
      %273 = vmatprep.subr.mxu0 0.0
      %274 = vmatpush1.msra.mxu0 0.0
      %275 = vmatprep.subr.mxu0 0.0
      %276 = vmatpush1.msra.mxu0 0.0
      %277 = vmatprep.subr.mxu0 0.0
      %278 = vmatpush1.msra.mxu0 0.0
      %279 = vmatprep.subr.mxu0 0.0
      %280 = vmatpush1.msra.mxu0 0.0
      %281 = vmatprep.subr.mxu0 0.0
      %282 = vmatpush1.msra.mxu0 0.0
      %283 = vmatprep.subr.mxu0 0.0
      %284 = vmatpush1.msra.mxu0 0.0
      %285 = vmatprep.subr.mxu0 0.0
      %286 = vmatpush1.msra.mxu0 0.0
      %287 = vmatprep.subr.mxu0 0.0
      %288 = vmatpush1.msra.mxu0 0.0
      %289 = vmatprep.subr.mxu0 0.0
      %290 = vmatpush1.msra.mxu0 0.0
      %291 = vmatprep.subr.mxu0 0.0
      %292 = vmatpush1.msra.mxu0 0.0
      %293 = vmatprep.mubr.f32.mxu0 0.0
      %294 = vmatmul.mubr.f32.gmra.mrb[0].mxu0 %v174
      %v295 = vpop.f32.mrb[0].mxu0
      %v296 = vadd.f32 %v227, %v295
      %v297 = vpop.f32.mrb[0].mxu0
      %298 = vmatprep.mubr.f32.mxu0 0.0
      %299 = vmatmul.mubr.f32.gmra.mrb[0].mxu0 %v175
      %v300 = vpop.f32.mrb[0].mxu0
      %v301 = vadd.f32 %v227, %v300
      %v302 = vpop.f32.mrb[0].mxu0
      %303 = vmatprep.mubr.f32.mxu0 0.0
      %304 = vmatmul.mubr.f32.gmra.mrb[0].mxu0 %v176
      %v305 = vpop.f32.mrb[0].mxu0
      %v306 = vadd.f32 %v227, %v305
      %v307 = vpop.f32.mrb[0].mxu0
      %308 = vmatprep.mubr.f32.mxu0 0.0
      %309 = vmatmul.mubr.f32.gmra.mrb[0].mxu0 %v177
      %v310 = vpop.f32.mrb[0].mxu0
      %v311 = vadd.f32 %v227, %v310
      %v312 = vpop.f32.mrb[0].mxu0
      %313 = vmatprep.mubr.f32.mxu0 0.0
      %314 = vmatmul.mubr.f32.gmra.mrb[0].mxu0 %v178
      %v315 = vpop.f32.mrb[0].mxu0
      %v316 = vadd.f32 %v227, %v315
      %v317 = vpop.f32.mrb[0].mxu0
      %318 = vmatprep.mubr.f32.mxu0 0.0
      %319 = vmatmul.mubr.f32.gmra.mrb[0].mxu0 %v179
      %v320 = vpop.f32.mrb[0].mxu0
      %v321 = vadd.f32 %v227, %v320
      %v322 = vpop.f32.mrb[0].mxu0
      %323 = vmatprep.mubr.f32.mxu0 0.0
      %324 = vmatmul.mubr.f32.gmra.mrb[0].mxu0 %v180
      %v325 = vpop.f32.mrb[0].mxu0
      %v326 = vadd.f32 %v227, %v325
      %v327 = vpop.f32.mrb[0].mxu0
      %328 = vmatprep.mubr.f32.mxu0 0.0
      %329 = vmatmul.mubr.f32.gmra.mrb[0].mxu0 %v181
      %v330 = vpop.f32.mrb[0].mxu0
      %v331 = vadd.f32 %v227, %v330
      %v332 = vpop.f32.mrb[0].mxu0
      %333 = vmatprep.mubr.f32.mxu0 0.0
      %334 = vmatmul.mubr.f32.gmra.mrb[0].mxu0 %v182
      %v335 = vpop.f32.mrb[0].mxu0
      %v336 = vadd.f32 %v227, %v335
      %v337 = vpop.f32.mrb[0].mxu0
      %338 = vmatprep.mubr.f32.mxu0 0.0
      %339 = vmatmul.mubr.f32.gmra.mrb[0].mxu0 %v183
      %v340 = vpop.f32.mrb[0].mxu0
      %v341 = vadd.f32 %v227, %v340
      %v342 = vpop.f32.mrb[0].mxu0
      %343 = vmatprep.mubr.f32.mxu0 0.0
      %344 = vmatmul.mubr.f32.gmra.mrb[0].mxu0 %v184
      %v345 = vpop.f32.mrb[0].mxu0
      %v346 = vadd.f32 %v227, %v345
      %v347 = vpop.f32.mrb[0].mxu0
      %348 = vmatprep.mubr.f32.mxu0 0.0
      %349 = vmatmul.mubr.f32.gmra.mrb[0].mxu0 %v185
      %v350 = vpop.f32.mrb[0].mxu0
      %v351 = vadd.f32 %v227, %v350
      %v352 = vpop.f32.mrb[0].mxu0
      %353 = vmatprep.mubr.f32.mxu0 0.0
      %354 = vmatmul.mubr.f32.gmra.mrb[0].mxu0 %v186
      %v355 = vpop.f32.mrb[0].mxu0
      %v356 = vadd.f32 %v227, %v355
      %v357 = vpop.f32.mrb[0].mxu0
      %358 = vmatprep.mubr.f32.mxu0 0.0
      %359 = vmatmul.mubr.f32.gmra.mrb[0].mxu0 %v187
      %v360 = vpop.f32.mrb[0].mxu0
      %v361 = vadd.f32 %v227, %v360
      %v362 = vpop.f32.mrb[0].mxu0
      %363 = vmatprep.mubr.f32.mxu0 0.0
      %364 = vmatmul.mubr.f32.gmra.mrb[0].mxu0 %v188
      %v365 = vpop.f32.mrb[0].mxu0
      %v366 = vadd.f32 %v227, %v365
      %v367 = vpop.f32.mrb[0].mxu0
      %368 = vmatprep.mubr.f32.mxu0 0.0
      %369 = vmatmul.mubr.f32.gmra.mrb[0].mxu0 %v189
      %v370 = vpop.f32.mrb[0].mxu0
      %v371 = vadd.f32 %v227, %v370
      %v372 = vpop.f32.mrb[0].mxu0
      %373 = vmatprep.mubr.f32.mxu0 0.0
      %374 = vmatmul.mubr.f32.gmra.mrb[0].mxu0 %v190
      %v375 = vpop.f32.mrb[0].mxu0
      %v376 = vadd.f32 %v227, %v375
      %v377 = vpop.f32.mrb[0].mxu0
      %378 = vmatprep.mubr.f32.mxu0 0.0
      %379 = vmatmul.mubr.f32.gmra.mrb[0].mxu0 %v191
      %v380 = vpop.f32.mrb[0].mxu0
      %v381 = vadd.f32 %v227, %v380
      %v382 = vpop.f32.mrb[0].mxu0
      %383 = vmatprep.mubr.f32.mxu0 0.0
      %384 = vmatmul.mubr.f32.gmra.mrb[0].mxu0 %v192
      %v385 = vpop.f32.mrb[0].mxu0
      %v386 = vadd.f32 %v227, %v385
      %v387 = vpop.f32.mrb[0].mxu0
      %388 = vmatprep.mubr.f32.mxu0 0.0
      %389 = vmatmul.mubr.f32.gmra.mrb[0].mxu0 %v193
      %v390 = vpop.f32.mrb[0].mxu0
      %v391 = vadd.f32 %v227, %v390
      %v392 = vpop.f32.mrb[0].mxu0
      %393 = vmatprep.mubr.f32.mxu0 0.0
      %394 = vmatmul.mubr.f32.gmra.mrb[0].mxu0 %v194
      %v395 = vpop.f32.mrb[0].mxu0
      %v396 = vadd.f32 %v227, %v395
      %v397 = vpop.f32.mrb[0].mxu0
      %398 = vmatprep.mubr.f32.mxu0 0.0
      %399 = vmatmul.mubr.f32.gmra.mrb[0].mxu0 %v195
      %v400 = vpop.f32.mrb[0].mxu0
      %v401 = vadd.f32 %v227, %v400
      %v402 = vpop.f32.mrb[0].mxu0
      %403 = vmatprep.mubr.f32.mxu0 0.0
      %404 = vmatmul.mubr.f32.gmra.mrb[0].mxu0 %v196
      %v405 = vpop.f32.mrb[0].mxu0
      %v406 = vadd.f32 %v227, %v405
      %v407 = vpop.f32.mrb[0].mxu0
      %408 = vmatprep.mubr.f32.mxu0 0.0
      %409 = vmatmul.mubr.f32.gmra.mrb[0].mxu0 %v197
      %v410 = vpop.f32.mrb[0].mxu0
      %v411 = vadd.f32 %v227, %v410
      %v412 = vpop.f32.mrb[0].mxu0
      %413 = vmatprep.mubr.f32.mxu0 0.0
      %414 = vmatmul.mubr.f32.gmra.mrb[0].mxu0 %v198
      %v415 = vpop.f32.mrb[0].mxu0
      %v416 = vadd.f32 %v227, %v415
      %v417 = vpop.f32.mrb[0].mxu0
      %418 = vmatprep.mubr.f32.mxu0 0.0
      %419 = vmatmul.mubr.f32.gmra.mrb[0].mxu0 %v199
      %v420 = vpop.f32.mrb[0].mxu0
      %v421 = vadd.f32 %v227, %v420
      %v422 = vpop.f32.mrb[0].mxu0
      %423 = vmatprep.mubr.f32.mxu0 0.0
      %424 = vmatmul.mubr.f32.gmra.mrb[0].mxu0 %v200
      %v425 = vpop.f32.mrb[0].mxu0
      %v426 = vadd.f32 %v227, %v425
      %v427 = vpop.f32.mrb[0].mxu0
      %428 = vmatprep.mubr.f32.mxu0 0.0
      %429 = vmatmul.mubr.f32.gmra.mrb[0].mxu0 %v201
      %v430 = vpop.f32.mrb[0].mxu0
      %v431 = vadd.f32 %v227, %v430
      %v432 = vpop.f32.mrb[0].mxu0
      %433 = vmatprep.mubr.f32.mxu0 0.0
      %434 = vmatmul.mubr.f32.gmra.mrb[0].mxu0 %v202
      %v435 = vpop.f32.mrb[0].mxu0
      %v436 = vadd.f32 %v227, %v435
      %v437 = vpop.f32.mrb[0].mxu0
      %438 = vmatprep.mubr.f32.mxu0 0.0
      %439 = vmatmul.mubr.f32.gmra.mrb[0].mxu0 %v203
      %v440 = vpop.f32.mrb[0].mxu0
      %v441 = vadd.f32 %v227, %v440
      %v442 = vpop.f32.mrb[0].mxu0
      %443 = vmatprep.mubr.f32.mxu0 0.0
      %444 = vmatmul.mubr.f32.gmra.mrb[0].mxu0 %v204
      %v445 = vpop.f32.mrb[0].mxu0
      %v446 = vadd.f32 %v227, %v445
      %v447 = vpop.f32.mrb[0].mxu0
      %448 = vmatprep.mubr.f32.mxu0 0.0
      %449 = vmatmul.mubr.f32.gmra.mrb[0].mxu0 %v205
      %v450 = vpop.f32.mrb[0].mxu0
      %v451 = vadd.f32 %v227, %v450
      %v452 = vpop.f32.mrb[0].mxu0
      %453 = vdwg.mxu0
      %v454 = vmul.f32 %v296, 0.2
      %v455 = vmul.f32 %v301, 0.2
      %v456 = vmul.f32 %v306, 0.2
      %v457 = vmul.f32 %v311, 0.2
      %v458 = vmul.f32 %v316, 0.2
      %v459 = vmul.f32 %v321, 0.2
      %v460 = vmul.f32 %v326, 0.2
      %v461 = vmul.f32 %v331, 0.2
      %v462 = vmul.f32 %v336, 0.2
      %v463 = vmul.f32 %v341, 0.2
      %v464 = vmul.f32 %v346, 0.2
      %v465 = vmul.f32 %v351, 0.2
      %v466 = vmul.f32 %v356, 0.2
      %v467 = vmul.f32 %v361, 0.2
      %v468 = vmul.f32 %v366, 0.2
      %v469 = vmul.f32 %v371, 0.2
      %v470 = vmul.f32 %v376, 0.2
      %v471 = vmul.f32 %v381, 0.2
      %v472 = vmul.f32 %v386, 0.2
      %v473 = vmul.f32 %v391, 0.2
      %v474 = vmul.f32 %v396, 0.2
      %v475 = vmul.f32 %v401, 0.2
      %v476 = vmul.f32 %v406, 0.2
      %v477 = vmul.f32 %v411, 0.2
      %v478 = vmul.f32 %v416, 0.2
      %v479 = vmul.f32 %v421, 0.2
      %v480 = vmul.f32 %v426, 0.2
      %v481 = vmul.f32 %v431, 0.2
      %v482 = vmul.f32 %v436, 0.2
      %v483 = vmul.f32 %v441, 0.2
      %v484 = vmul.f32 %v446, 0.2
      %v485 = vmul.f32 %v451, 0.2
      %v486 = vmax.f32 %v296, %v454
      %v487 = vmax.f32 %v301, %v455
      %v488 = vmax.f32 %v306, %v456
      %v489 = vmax.f32 %v311, %v457
      %v490 = vmax.f32 %v316, %v458
      %v491 = vmax.f32 %v321, %v459
      %v492 = vmax.f32 %v326, %v460
      %v493 = vmax.f32 %v331, %v461
      %v494 = vmax.f32 %v336, %v462
      %v495 = vmax.f32 %v341, %v463
      %v496 = vmax.f32 %v346, %v464
      %v497 = vmax.f32 %v351, %v465
      %v498 = vmax.f32 %v356, %v466
      %v499 = vmax.f32 %v361, %v467
      %v500 = vmax.f32 %v366, %v468
      %v501 = vmax.f32 %v371, %v469
      %v502 = vmax.f32 %v376, %v470
      %v503 = vmax.f32 %v381, %v471
      %v504 = vmax.f32 %v386, %v472
      %v505 = vmax.f32 %v391, %v473
      %v506 = vmax.f32 %v396, %v474
      %v507 = vmax.f32 %v401, %v475
      %v508 = vmax.f32 %v406, %v476
      %v509 = vmax.f32 %v411, %v477
      %v510 = vmax.f32 %v416, %v478
      %v511 = vmax.f32 %v421, %v479
      %v512 = vmax.f32 %v426, %v480
      %v513 = vmax.f32 %v431, %v481
      %v514 = vmax.f32 %v436, %v482
      %v515 = vmax.f32 %v441, %v483
      %v516 = vmax.f32 %v446, %v484
      %v517 = vmax.f32 %v451, %v485
      %vm518 = vcmask 130048
      %519 = vst.msk [vmem:[%s172] sm:$0xff] %vm518, %v486
      %520 = vst.msk [vmem:[%s172 + $0x8] sm:$0xff] %vm518, %v487
      %521 = vst.msk [vmem:[%s172 + $0x10] sm:$0xff] %vm518, %v488
      %522 = vst.msk [vmem:[%s172 + $0x18] sm:$0xff] %vm518, %v489
      %523 = vst.msk [vmem:[%s172 + $0x20] sm:$0xff] %vm518, %v490
      %524 = vst.msk [vmem:[%s172 + $0x28] sm:$0xff] %vm518, %v491
      %525 = vst.msk [vmem:[%s172 + $0x30] sm:$0xff] %vm518, %v492
      %526 = vst.msk [vmem:[%s172 + $0x38] sm:$0xff] %vm518, %v493
      %527 = vst.msk [vmem:[%s172 + $0x40] sm:$0xff] %vm518, %v494
      %528 = vst.msk [vmem:[%s172 + $0x48] sm:$0xff] %vm518, %v495
      %529 = vst.msk [vmem:[%s172 + $0x50] sm:$0xff] %vm518, %v496
      %530 = vst.msk [vmem:[%s172 + $0x58] sm:$0xff] %vm518, %v497
      %531 = vst.msk [vmem:[%s172 + $0x60] sm:$0xff] %vm518, %v498
      %532 = vst.msk [vmem:[%s172 + $0x68] sm:$0xff] %vm518, %v499
      %533 = vst.msk [vmem:[%s172 + $0x70] sm:$0xff] %vm518, %v500
      %534 = vst.msk [vmem:[%s172 + $0x78] sm:$0xff] %vm518, %v501
      %535 = vst.msk [vmem:[%s172 + $0x80] sm:$0xff] %vm518, %v502
      %536 = vst.msk [vmem:[%s172 + $0x88] sm:$0xff] %vm518, %v503
      %537 = vst.msk [vmem:[%s172 + $0x90] sm:$0xff] %vm518, %v504
      %538 = vst.msk [vmem:[%s172 + $0x98] sm:$0xff] %vm518, %v505
      %539 = vst.msk [vmem:[%s172 + $0xa0] sm:$0xff] %vm518, %v506
      %540 = vst.msk [vmem:[%s172 + $0xa8] sm:$0xff] %vm518, %v507
      %541 = vst.msk [vmem:[%s172 + $0xb0] sm:$0xff] %vm518, %v508
      %542 = vst.msk [vmem:[%s172 + $0xb8] sm:$0xff] %vm518, %v509
      %543 = vst.msk [vmem:[%s172 + $0xc0] sm:$0xff] %vm518, %v510
      %544 = vst.msk [vmem:[%s172 + $0xc8] sm:$0xff] %vm518, %v511
      %545 = vst.msk [vmem:[%s172 + $0xd0] sm:$0xff] %vm518, %v512
      %546 = vst.msk [vmem:[%s172 + $0xd8] sm:$0xff] %vm518, %v513
      %547 = vst.msk [vmem:[%s172 + $0xe0] sm:$0xff] %vm518, %v514
      %548 = vst.msk [vmem:[%s172 + $0xe8] sm:$0xff] %vm518, %v515
      %549 = vst.msk [vmem:[%s172 + $0xf0] sm:$0xff] %vm518, %v516
      %550 = vst.msk [vmem:[%s172 + $0xf8] sm:$0xff] %vm518, %v517
      %s551 = smul.u32 32, %s14
      %p552 = scmp.lt.s32.totalorder %s551, 63
      %s553 = scalar_select %p552, %s551, 63
      %s554 = smul.addr %s553, 8
      %s555 = scalar_lea.vmem %s3, %s554
      // Predicated region
      $region33: #{wgan_critic_forward.6} parent=31 // pred_check
        %p556 = pneg %p100
      $region34: #{wgan_critic_forward.6} parent=31 // pred_check_branch
        %558 = sbr.rel (%p556) target = $region36
      $region35: #{wgan_critic_forward.6} parent=31 // pred_region
        %s559 = smul.u32 32, %s14
      $region36: #{wgan_critic_forward.6} parent=31 // pred_fallthru
        _
    $region32: #{wgan_critic_forward.6} parent=5 // pred_fallthru
      _
    %p560 = scmp.le.s32.totalorder 2, %s9
    // Predicated region
    $region37: #{wgan_critic_forward.6} parent=5 // pred_check
      %p561 = pneg %p560
    $region38: #{wgan_critic_forward.6} parent=5 // pred_check_branch
      %563 = sbr.rel (%p561) target = $region40
    $region39: #{wgan_critic_forward.6} parent=5 // pred_region
      %s564 = ssub.s32 %s9, 2
      // Predicated region
      $region41: #{wgan_critic_forward.6} parent=39 // pred_check
        %p565 = pneg %p106
      $region42: #{wgan_critic_forward.6} parent=39 // pred_check_branch
        %567 = sbr.rel (%p565) target = $region44
      $region43: #{wgan_critic_forward.6} parent=39 // pred_region
        %s568 = smul.u32 32, %s15
        %p569 = scmp.lt.s32.totalorder %s568, 63
        %s570 = scalar_select %p569, %s568, 63
        %s571 = smul.addr %s570, 8
        %s572 = scalar_lea.vmem %s3, %s571
      $region44: #{wgan_critic_forward.6} parent=39 // pred_fallthru
        _
    $region40: #{wgan_critic_forward.6} parent=5 // pred_fallthru
      _
  $region6: #{wgan_critic_forward.6} parent=0 // loop_footer
    %s13 = sadd.s32 1, %s9
  $region7: #{wgan_critic_forward.6} parent=0 // loop_footer_branch
    %8 = sbr.rel target = $region3
  $region8: #{wgan_critic_forward.6} parent=0 // loop_exit
    _

// kernel: wgan_critic_forward.7
$region0: #{wgan_critic_forward.7}
  #allocation0 [shape = 'u32[]', space=smem, size = 0x4, offset = 0x4, fixed_abs, tag = 'smem constant byte address 0x4 - core index']
  #allocation1 [shape = 'u32[144,128]{1,0:T(1,128)}', space=vmem, size = 0x12000, scoped, tag = 'internal scratch']
  %s0 = inlined_call_operand.vmem [shape: f32[128,256], index: 0, kind: input, shape index: {}]
  %s1 = inlined_call_operand.vmem [shape: f32[256,32], index: 1, kind: input, shape index: {}]
  %s2 = inlined_call_operand.vmem [shape: f32[1,32], index: 2, kind: input, shape index: {}]
  %s3 = inlined_call_operand.vmem [shape: f32[128,32], index: 3, kind: output, shape index: {}]
  %s4 = sld [smem:[#allocation0]]
  $region22: #{wgan_critic_forward.7} parent=0
    _
  %s6 = ssub.s32 1, %s4
  %s7 = scalar_select 0, %s6, %s4
  // Predicated region
  $region2: #{wgan_critic_forward.7} parent=0 // pred_check
    _
  $region3: #{wgan_critic_forward.7} parent=0 // pred_check_branch
    %9 = sbr.rel (0) target = $region5
  $region4: #{wgan_critic_forward.7} parent=0 // pred_region
    _
  $region5: #{wgan_critic_forward.7} parent=0 // pred_fallthru
    _
  // Predicated region
  $region6: #{wgan_critic_forward.7} parent=0 // pred_check
    _
  $region7: #{wgan_critic_forward.7} parent=0 // pred_check_branch
    %11 = sbr.rel (0) target = $region9
  $region8: #{wgan_critic_forward.7} parent=0 // pred_region
    _
  $region9: #{wgan_critic_forward.7} parent=0 // pred_fallthru
    _
  // Predicated region
  $region10: #{wgan_critic_forward.7} parent=0 // pred_check
    _
  $region11: #{wgan_critic_forward.7} parent=0 // pred_check_branch
    %13 = sbr.rel (0) target = $region13
  $region12: #{wgan_critic_forward.7} parent=0 // pred_region
    _
  $region13: #{wgan_critic_forward.7} parent=0 // pred_fallthru
    _
  %v14 = vld [vmem:[%s0] sm:$0xff]
  %v15 = vld [vmem:[%s0 + $0x8] sm:$0xff]
  %v16 = vld [vmem:[%s0 + $0x10] sm:$0xff]
  %v17 = vld [vmem:[%s0 + $0x18] sm:$0xff]
  %v18 = vld [vmem:[%s0 + $0x20] sm:$0xff]
  %v19 = vld [vmem:[%s0 + $0x28] sm:$0xff]
  %v20 = vld [vmem:[%s0 + $0x30] sm:$0xff]
  %v21 = vld [vmem:[%s0 + $0x38] sm:$0xff]
  %v22 = vld [vmem:[%s0 + $0x40] sm:$0xff]
  %v23 = vld [vmem:[%s0 + $0x48] sm:$0xff]
  %v24 = vld [vmem:[%s0 + $0x50] sm:$0xff]
  %v25 = vld [vmem:[%s0 + $0x58] sm:$0xff]
  %v26 = vld [vmem:[%s0 + $0x60] sm:$0xff]
  %v27 = vld [vmem:[%s0 + $0x68] sm:$0xff]
  %v28 = vld [vmem:[%s0 + $0x70] sm:$0xff]
  %v29 = vld [vmem:[%s0 + $0x78] sm:$0xff]
  %v30 = vld [vmem:[%s0 + $0x80] sm:$0xff]
  %v31 = vld [vmem:[%s0 + $0x88] sm:$0xff]
  %v32 = vld [vmem:[%s0 + $0x90] sm:$0xff]
  %v33 = vld [vmem:[%s0 + $0x98] sm:$0xff]
  %v34 = vld [vmem:[%s0 + $0xa0] sm:$0xff]
  %v35 = vld [vmem:[%s0 + $0xa8] sm:$0xff]
  %v36 = vld [vmem:[%s0 + $0xb0] sm:$0xff]
  %v37 = vld [vmem:[%s0 + $0xb8] sm:$0xff]
  %v38 = vld [vmem:[%s0 + $0xc0] sm:$0xff]
  %v39 = vld [vmem:[%s0 + $0xc8] sm:$0xff]
  %v40 = vld [vmem:[%s0 + $0xd0] sm:$0xff]
  %v41 = vld [vmem:[%s0 + $0xd8] sm:$0xff]
  %v42 = vld [vmem:[%s0 + $0xe0] sm:$0xff]
  %v43 = vld [vmem:[%s0 + $0xe8] sm:$0xff]
  %v44 = vld [vmem:[%s0 + $0xf0] sm:$0xff]
  %v45 = vld [vmem:[%s0 + $0xf8] sm:$0xff]
  %v46 = vld [vmem:[%s1] sm:$0xff]
  %v47 = vld [vmem:[%s1 + $0x8] sm:$0xff]
  %v48 = vld [vmem:[%s1 + $0x10] sm:$0xff]
  %v49 = vld [vmem:[%s1 + $0x18] sm:$0xff]
  %v50 = vld [vmem:[%s1 + $0x20] sm:$0xff]
  %v51 = vld [vmem:[%s1 + $0x28] sm:$0xff]
  %v52 = vld [vmem:[%s1 + $0x30] sm:$0xff]
  %v53 = vld [vmem:[%s1 + $0x38] sm:$0xff]
  %v54 = vld [vmem:[%s1 + $0x40] sm:$0xff]
  %v55 = vld [vmem:[%s1 + $0x48] sm:$0xff]
  %v56 = vld [vmem:[%s1 + $0x50] sm:$0xff]
  %v57 = vld [vmem:[%s1 + $0x58] sm:$0xff]
  %v58 = vld [vmem:[%s1 + $0x60] sm:$0xff]
  %v59 = vld [vmem:[%s1 + $0x68] sm:$0xff]
  %v60 = vld [vmem:[%s1 + $0x70] sm:$0xff]
  %v61 = vld [vmem:[%s1 + $0x78] sm:$0xff]
  %v62 = vld [vmem:[%s1 + $0x80] sm:$0xff]
  %v63 = vld [vmem:[%s1 + $0x88] sm:$0xff]
  %v64 = vld [vmem:[%s1 + $0x90] sm:$0xff]
  %v65 = vld [vmem:[%s1 + $0x98] sm:$0xff]
  %v66 = vld [vmem:[%s1 + $0xa0] sm:$0xff]
  %v67 = vld [vmem:[%s1 + $0xa8] sm:$0xff]
  %v68 = vld [vmem:[%s1 + $0xb0] sm:$0xff]
  %v69 = vld [vmem:[%s1 + $0xb8] sm:$0xff]
  %v70 = vld [vmem:[%s1 + $0xc0] sm:$0xff]
  %v71 = vld [vmem:[%s1 + $0xc8] sm:$0xff]
  %v72 = vld [vmem:[%s1 + $0xd0] sm:$0xff]
  %v73 = vld [vmem:[%s1 + $0xd8] sm:$0xff]
  %v74 = vld [vmem:[%s1 + $0xe0] sm:$0xff]
  %v75 = vld [vmem:[%s1 + $0xe8] sm:$0xff]
  %v76 = vld [vmem:[%s1 + $0xf0] sm:$0xff]
  %v77 = vld [vmem:[%s1 + $0xf8] sm:$0xff]
  %v78 = vld [vmem:[%s2] sm:$0x1]
  %v80 = vlaneseq
  %v81 = vshrl.u32 %v80, 7
  %v82 = vsub.s32 0, %v81
  %v83 = vrot.slane %v78, %v82
  %85 = vmatprep.subr.mxu0 0.0
  %86 = vmatpush1.msra.mxu0 %v46
  %87 = vmatprep.subr.mxu0 0.0
  %88 = vmatpush1.msra.mxu0 %v47
  %89 = vmatprep.subr.mxu0 0.0
  %90 = vmatpush1.msra.mxu0 %v48
  %91 = vmatprep.subr.mxu0 0.0
  %92 = vmatpush1.msra.mxu0 %v49
  %93 = vmatprep.subr.mxu0 0.0
  %94 = vmatpush1.msra.mxu0 %v50
  %95 = vmatprep.subr.mxu0 0.0
  %96 = vmatpush1.msra.mxu0 %v51
  %97 = vmatprep.subr.mxu0 0.0
  %98 = vmatpush1.msra.mxu0 %v52
  %99 = vmatprep.subr.mxu0 0.0
  %100 = vmatpush1.msra.mxu0 %v53
  %101 = vmatprep.subr.mxu0 0.0
  %102 = vmatpush1.msra.mxu0 %v54
  %103 = vmatprep.subr.mxu0 0.0
  %104 = vmatpush1.msra.mxu0 %v55
  %105 = vmatprep.subr.mxu0 0.0
  %106 = vmatpush1.msra.mxu0 %v56
  %107 = vmatprep.subr.mxu0 0.0
  %108 = vmatpush1.msra.mxu0 %v57
  %109 = vmatprep.subr.mxu0 0.0
  %110 = vmatpush1.msra.mxu0 %v58
  %111 = vmatprep.subr.mxu0 0.0
  %112 = vmatpush1.msra.mxu0 %v59
  %113 = vmatprep.subr.mxu0 0.0
  %114 = vmatpush1.msra.mxu0 %v60
  %115 = vmatprep.subr.mxu0 0.0
  %116 = vmatpush1.msra.mxu0 %v61
  %117 = vmatprep.subr.mxu0 0.0
  %118 = vmatpush1.msra.mxu0 %v62
  %119 = vmatprep.subr.mxu0 0.0
  %120 = vmatpush1.msra.mxu0 %v63
  %121 = vmatprep.subr.mxu0 0.0
  %122 = vmatpush1.msra.mxu0 %v64
  %123 = vmatprep.subr.mxu0 0.0
  %124 = vmatpush1.msra.mxu0 %v65
  %125 = vmatprep.subr.mxu0 0.0
  %126 = vmatpush1.msra.mxu0 %v66
  %127 = vmatprep.subr.mxu0 0.0
  %128 = vmatpush1.msra.mxu0 %v67
  %129 = vmatprep.subr.mxu0 0.0
  %130 = vmatpush1.msra.mxu0 %v68
  %131 = vmatprep.subr.mxu0 0.0
  %132 = vmatpush1.msra.mxu0 %v69
  %133 = vmatprep.subr.mxu0 0.0
  %134 = vmatpush1.msra.mxu0 %v70
  %135 = vmatprep.subr.mxu0 0.0
  %136 = vmatpush1.msra.mxu0 %v71
  %137 = vmatprep.subr.mxu0 0.0
  %138 = vmatpush1.msra.mxu0 %v72
  %139 = vmatprep.subr.mxu0 0.0
  %140 = vmatpush1.msra.mxu0 %v73
  %141 = vmatprep.subr.mxu0 0.0
  %142 = vmatpush1.msra.mxu0 %v74
  %143 = vmatprep.subr.mxu0 0.0
  %144 = vmatpush1.msra.mxu0 %v75
  %145 = vmatprep.subr.mxu0 0.0
  %146 = vmatpush1.msra.mxu0 %v76
  %147 = vmatprep.subr.mxu0 0.0
  %148 = vmatpush1.msra.mxu0 %v77
  %149 = vmatprep.mubr.f32.mxu0 %v15
  %150 = vmatmul.mubr.f32.gmra.mrb[0].mxu0 %v14
  %v151 = vpop.f32.mrb[0].mxu0
  %v152 = vadd.f32 %v83, %v151
  %v153 = vpop.f32.mrb[0].mxu0
  %154 = vmatprep.mubr.f32.mxu0 %v17
  %155 = vmatmul.mubr.f32.gmra.mrb[0].mxu0 %v16
  %v156 = vpop.f32.mrb[0].mxu0
  %v157 = vadd.f32 %v83, %v156
  %v158 = vpop.f32.mrb[0].mxu0
  %159 = vmatprep.mubr.f32.mxu0 %v19
  %160 = vmatmul.mubr.f32.gmra.mrb[0].mxu0 %v18
  %v161 = vpop.f32.mrb[0].mxu0
  %v162 = vadd.f32 %v83, %v161
  %v163 = vpop.f32.mrb[0].mxu0
  %164 = vmatprep.mubr.f32.mxu0 %v21
  %165 = vmatmul.mubr.f32.gmra.mrb[0].mxu0 %v20
  %v166 = vpop.f32.mrb[0].mxu0
  %v167 = vadd.f32 %v83, %v166
  %v168 = vpop.f32.mrb[0].mxu0
  %169 = vmatprep.mubr.f32.mxu0 %v23
  %170 = vmatmul.mubr.f32.gmra.mrb[0].mxu0 %v22
  %v171 = vpop.f32.mrb[0].mxu0
  %v172 = vadd.f32 %v83, %v171
  %v173 = vpop.f32.mrb[0].mxu0
  %174 = vmatprep.mubr.f32.mxu0 %v25
  %175 = vmatmul.mubr.f32.gmra.mrb[0].mxu0 %v24
  %v176 = vpop.f32.mrb[0].mxu0
  %v177 = vadd.f32 %v83, %v176
  %v178 = vpop.f32.mrb[0].mxu0
  %179 = vmatprep.mubr.f32.mxu0 %v27
  %180 = vmatmul.mubr.f32.gmra.mrb[0].mxu0 %v26
  %v181 = vpop.f32.mrb[0].mxu0
  %v182 = vadd.f32 %v83, %v181
  %v183 = vpop.f32.mrb[0].mxu0
  %184 = vmatprep.mubr.f32.mxu0 %v29
  %185 = vmatmul.mubr.f32.gmra.mrb[0].mxu0 %v28
  %v186 = vpop.f32.mrb[0].mxu0
  %v187 = vadd.f32 %v83, %v186
  %v188 = vpop.f32.mrb[0].mxu0
  %189 = vmatprep.mubr.f32.mxu0 %v31
  %190 = vmatmul.mubr.f32.gmra.mrb[0].mxu0 %v30
  %v191 = vpop.f32.mrb[0].mxu0
  %v192 = vadd.f32 %v83, %v191
  %v193 = vpop.f32.mrb[0].mxu0
  %194 = vmatprep.mubr.f32.mxu0 %v33
  %195 = vmatmul.mubr.f32.gmra.mrb[0].mxu0 %v32
  %v196 = vpop.f32.mrb[0].mxu0
  %v197 = vadd.f32 %v83, %v196
  %v198 = vpop.f32.mrb[0].mxu0
  %199 = vmatprep.mubr.f32.mxu0 %v35
  %200 = vmatmul.mubr.f32.gmra.mrb[0].mxu0 %v34
  %v201 = vpop.f32.mrb[0].mxu0
  %v202 = vadd.f32 %v83, %v201
  %v203 = vpop.f32.mrb[0].mxu0
  %204 = vmatprep.mubr.f32.mxu0 %v37
  %205 = vmatmul.mubr.f32.gmra.mrb[0].mxu0 %v36
  %v206 = vpop.f32.mrb[0].mxu0
  %v207 = vadd.f32 %v83, %v206
  %v208 = vpop.f32.mrb[0].mxu0
  %209 = vmatprep.mubr.f32.mxu0 %v39
  %210 = vmatmul.mubr.f32.gmra.mrb[0].mxu0 %v38
  %v211 = vpop.f32.mrb[0].mxu0
  %v212 = vadd.f32 %v83, %v211
  %v213 = vpop.f32.mrb[0].mxu0
  %214 = vmatprep.mubr.f32.mxu0 %v41
  %215 = vmatmul.mubr.f32.gmra.mrb[0].mxu0 %v40
  %v216 = vpop.f32.mrb[0].mxu0
  %v217 = vadd.f32 %v83, %v216
  %v218 = vpop.f32.mrb[0].mxu0
  %219 = vmatprep.mubr.f32.mxu0 %v43
  %220 = vmatmul.mubr.f32.gmra.mrb[0].mxu0 %v42
  %v221 = vpop.f32.mrb[0].mxu0
  %v222 = vadd.f32 %v83, %v221
  %v223 = vpop.f32.mrb[0].mxu0
  %224 = vmatprep.mubr.f32.mxu0 %v45
  %225 = vmatmul.mubr.f32.gmra.mrb[0].mxu0 %v44
  %v226 = vpop.f32.mrb[0].mxu0
  %v227 = vadd.f32 %v83, %v226
  %v228 = vpop.f32.mrb[0].mxu0
  %229 = vdwg.mxu0
  %v230 = vmul.f32 %v152, 0.2
  %v231 = vmul.f32 %v157, 0.2
  %v232 = vmul.f32 %v162, 0.2
  %v233 = vmul.f32 %v167, 0.2
  %v234 = vmul.f32 %v172, 0.2
  %v235 = vmul.f32 %v177, 0.2
  %v236 = vmul.f32 %v182, 0.2
  %v237 = vmul.f32 %v187, 0.2
  %v238 = vmul.f32 %v192, 0.2
  %v239 = vmul.f32 %v197, 0.2
  %v240 = vmul.f32 %v202, 0.2
  %v241 = vmul.f32 %v207, 0.2
  %v242 = vmul.f32 %v212, 0.2
  %v243 = vmul.f32 %v217, 0.2
  %v244 = vmul.f32 %v222, 0.2
  %v245 = vmul.f32 %v227, 0.2
  %v246 = vmax.f32 %v152, %v230
  %v247 = vmax.f32 %v157, %v231
  %v248 = vmax.f32 %v162, %v232
  %v249 = vmax.f32 %v167, %v233
  %v250 = vmax.f32 %v172, %v234
  %v251 = vmax.f32 %v177, %v235
  %v252 = vmax.f32 %v182, %v236
  %v253 = vmax.f32 %v187, %v237
  %v254 = vmax.f32 %v192, %v238
  %v255 = vmax.f32 %v197, %v239
  %v256 = vmax.f32 %v202, %v240
  %v257 = vmax.f32 %v207, %v241
  %v258 = vmax.f32 %v212, %v242
  %v259 = vmax.f32 %v217, %v243
  %v260 = vmax.f32 %v222, %v244
  %v261 = vmax.f32 %v227, %v245
  %vm262 = vcmask 261120
  %263 = vst.msk [vmem:[%s3] sm:$0xff] %vm262, %v246
  %264 = vst.msk [vmem:[%s3 + $0x8] sm:$0xff] %vm262, %v247
  %265 = vst.msk [vmem:[%s3 + $0x10] sm:$0xff] %vm262, %v248
  %266 = vst.msk [vmem:[%s3 + $0x18] sm:$0xff] %vm262, %v249
  %267 = vst.msk [vmem:[%s3 + $0x20] sm:$0xff] %vm262, %v250
  %268 = vst.msk [vmem:[%s3 + $0x28] sm:$0xff] %vm262, %v251
  %269 = vst.msk [vmem:[%s3 + $0x30] sm:$0xff] %vm262, %v252
  %270 = vst.msk [vmem:[%s3 + $0x38] sm:$0xff] %vm262, %v253
  %271 = vst.msk [vmem:[%s3 + $0x40] sm:$0xff] %vm262, %v254
  %272 = vst.msk [vmem:[%s3 + $0x48] sm:$0xff] %vm262, %v255
  %273 = vst.msk [vmem:[%s3 + $0x50] sm:$0xff] %vm262, %v256
  %274 = vst.msk [vmem:[%s3 + $0x58] sm:$0xff] %vm262, %v257
  %275 = vst.msk [vmem:[%s3 + $0x60] sm:$0xff] %vm262, %v258
  %276 = vst.msk [vmem:[%s3 + $0x68] sm:$0xff] %vm262, %v259
  %277 = vst.msk [vmem:[%s3 + $0x70] sm:$0xff] %vm262, %v260
  %278 = vst.msk [vmem:[%s3 + $0x78] sm:$0xff] %vm262, %v261
  // Predicated region
  $region14: #{wgan_critic_forward.7} parent=0 // pred_check
    _
  $region15: #{wgan_critic_forward.7} parent=0 // pred_check_branch
    %280 = sbr.rel (0) target = $region17
  $region16: #{wgan_critic_forward.7} parent=0 // pred_region
    _
  $region17: #{wgan_critic_forward.7} parent=0 // pred_fallthru
    _
  // Predicated region
  $region18: #{wgan_critic_forward.7} parent=0 // pred_check
    _
  $region19: #{wgan_critic_forward.7} parent=0 // pred_check_branch
    %282 = sbr.rel (0) target = $region21
  $region20: #{wgan_critic_forward.7} parent=0 // pred_region
    _
  $region21: #{wgan_critic_forward.7} parent=0 // pred_fallthru
    _

// kernel: wgan_critic_forward.8
$region0: #{wgan_critic_forward.8}
  #allocation0 [shape = 'u32[]', space=smem, size = 0x4, offset = 0x4, fixed_abs, tag = 'smem constant byte address 0x4 - core index']
  #allocation1 [shape = 'u32[144,128]{1,0:T(1,128)}', space=vmem, size = 0x12000, scoped, tag = 'internal scratch']
  %s0 = inlined_call_operand.vmem [shape: f32[32,512], index: 0, kind: input, shape index: {}]
  %s1 = inlined_call_operand.vmem [shape: f32[512,64], index: 1, kind: input, shape index: {}]
  %s2 = inlined_call_operand.vmem [shape: f32[1,64], index: 2, kind: input, shape index: {}]
  %s3 = inlined_call_operand.vmem [shape: f32[32,64], index: 3, kind: output, shape index: {}]
  %s4 = sld [smem:[#allocation0]]
  $region22: #{wgan_critic_forward.8} parent=0
    _
  %s6 = ssub.s32 1, %s4
  %s7 = scalar_select 0, %s6, %s4
  // Predicated region
  $region2: #{wgan_critic_forward.8} parent=0 // pred_check
    _
  $region3: #{wgan_critic_forward.8} parent=0 // pred_check_branch
    %9 = sbr.rel (0) target = $region5
  $region4: #{wgan_critic_forward.8} parent=0 // pred_region
    _
  $region5: #{wgan_critic_forward.8} parent=0 // pred_fallthru
    _
  // Predicated region
  $region6: #{wgan_critic_forward.8} parent=0 // pred_check
    _
  $region7: #{wgan_critic_forward.8} parent=0 // pred_check_branch
    %11 = sbr.rel (0) target = $region9
  $region8: #{wgan_critic_forward.8} parent=0 // pred_region
    _
  $region9: #{wgan_critic_forward.8} parent=0 // pred_fallthru
    _
  // Predicated region
  $region10: #{wgan_critic_forward.8} parent=0 // pred_check
    _
  $region11: #{wgan_critic_forward.8} parent=0 // pred_check_branch
    %13 = sbr.rel (0) target = $region13
  $region12: #{wgan_critic_forward.8} parent=0 // pred_region
    _
  $region13: #{wgan_critic_forward.8} parent=0 // pred_fallthru
    _
  %v14 = vld [vmem:[%s0] sm:$0xff]
  %v15 = vld [vmem:[%s0 + $0x8] sm:$0xff]
  %v16 = vld [vmem:[%s0 + $0x10] sm:$0xff]
  %v17 = vld [vmem:[%s0 + $0x18] sm:$0xff]
  %v18 = vld [vmem:[%s0 + $0x20] sm:$0xff]
  %v19 = vld [vmem:[%s0 + $0x28] sm:$0xff]
  %v20 = vld [vmem:[%s0 + $0x30] sm:$0xff]
  %v21 = vld [vmem:[%s0 + $0x38] sm:$0xff]
  %v22 = vld [vmem:[%s0 + $0x40] sm:$0xff]
  %v23 = vld [vmem:[%s0 + $0x48] sm:$0xff]
  %v24 = vld [vmem:[%s0 + $0x50] sm:$0xff]
  %v25 = vld [vmem:[%s0 + $0x58] sm:$0xff]
  %v26 = vld [vmem:[%s0 + $0x60] sm:$0xff]
  %v27 = vld [vmem:[%s0 + $0x68] sm:$0xff]
  %v28 = vld [vmem:[%s0 + $0x70] sm:$0xff]
  %v29 = vld [vmem:[%s0 + $0x78] sm:$0xff]
  %v30 = vld [vmem:[%s1] sm:$0xff]
  %v31 = vld [vmem:[%s1 + $0x8] sm:$0xff]
  %v32 = vld [vmem:[%s1 + $0x10] sm:$0xff]
  %v33 = vld [vmem:[%s1 + $0x18] sm:$0xff]
  %v34 = vld [vmem:[%s1 + $0x20] sm:$0xff]
  %v35 = vld [vmem:[%s1 + $0x28] sm:$0xff]
  %v36 = vld [vmem:[%s1 + $0x30] sm:$0xff]
  %v37 = vld [vmem:[%s1 + $0x38] sm:$0xff]
  %v38 = vld [vmem:[%s1 + $0x40] sm:$0xff]
  %v39 = vld [vmem:[%s1 + $0x48] sm:$0xff]
  %v40 = vld [vmem:[%s1 + $0x50] sm:$0xff]
  %v41 = vld [vmem:[%s1 + $0x58] sm:$0xff]
  %v42 = vld [vmem:[%s1 + $0x60] sm:$0xff]
  %v43 = vld [vmem:[%s1 + $0x68] sm:$0xff]
  %v44 = vld [vmem:[%s1 + $0x70] sm:$0xff]
  %v45 = vld [vmem:[%s1 + $0x78] sm:$0xff]
  %v46 = vld [vmem:[%s1 + $0x80] sm:$0xff]
  %v47 = vld [vmem:[%s1 + $0x88] sm:$0xff]
  %v48 = vld [vmem:[%s1 + $0x90] sm:$0xff]
  %v49 = vld [vmem:[%s1 + $0x98] sm:$0xff]
  %v50 = vld [vmem:[%s1 + $0xa0] sm:$0xff]
  %v51 = vld [vmem:[%s1 + $0xa8] sm:$0xff]
  %v52 = vld [vmem:[%s1 + $0xb0] sm:$0xff]
  %v53 = vld [vmem:[%s1 + $0xb8] sm:$0xff]
  %v54 = vld [vmem:[%s1 + $0xc0] sm:$0xff]
  %v55 = vld [vmem:[%s1 + $0xc8] sm:$0xff]
  %v56 = vld [vmem:[%s1 + $0xd0] sm:$0xff]
  %v57 = vld [vmem:[%s1 + $0xd8] sm:$0xff]
  %v58 = vld [vmem:[%s1 + $0xe0] sm:$0xff]
  %v59 = vld [vmem:[%s1 + $0xe8] sm:$0xff]
  %v60 = vld [vmem:[%s1 + $0xf0] sm:$0xff]
  %v61 = vld [vmem:[%s1 + $0xf8] sm:$0xff]
  %v62 = vld [vmem:[%s1 + $0x100] sm:$0xff]
  %v63 = vld [vmem:[%s1 + $0x108] sm:$0xff]
  %v64 = vld [vmem:[%s1 + $0x110] sm:$0xff]
  %v65 = vld [vmem:[%s1 + $0x118] sm:$0xff]
  %v66 = vld [vmem:[%s1 + $0x120] sm:$0xff]
  %v67 = vld [vmem:[%s1 + $0x128] sm:$0xff]
  %v68 = vld [vmem:[%s1 + $0x130] sm:$0xff]
  %v69 = vld [vmem:[%s1 + $0x138] sm:$0xff]
  %v70 = vld [vmem:[%s1 + $0x140] sm:$0xff]
  %v71 = vld [vmem:[%s1 + $0x148] sm:$0xff]
  %v72 = vld [vmem:[%s1 + $0x150] sm:$0xff]
  %v73 = vld [vmem:[%s1 + $0x158] sm:$0xff]
  %v74 = vld [vmem:[%s1 + $0x160] sm:$0xff]
  %v75 = vld [vmem:[%s1 + $0x168] sm:$0xff]
  %v76 = vld [vmem:[%s1 + $0x170] sm:$0xff]
  %v77 = vld [vmem:[%s1 + $0x178] sm:$0xff]
  %v78 = vld [vmem:[%s1 + $0x180] sm:$0xff]
  %v79 = vld [vmem:[%s1 + $0x188] sm:$0xff]
  %v80 = vld [vmem:[%s1 + $0x190] sm:$0xff]
  %v81 = vld [vmem:[%s1 + $0x198] sm:$0xff]
  %v82 = vld [vmem:[%s1 + $0x1a0] sm:$0xff]
  %v83 = vld [vmem:[%s1 + $0x1a8] sm:$0xff]
  %v84 = vld [vmem:[%s1 + $0x1b0] sm:$0xff]
  %v85 = vld [vmem:[%s1 + $0x1b8] sm:$0xff]
  %v86 = vld [vmem:[%s1 + $0x1c0] sm:$0xff]
  %v87 = vld [vmem:[%s1 + $0x1c8] sm:$0xff]
  %v88 = vld [vmem:[%s1 + $0x1d0] sm:$0xff]
  %v89 = vld [vmem:[%s1 + $0x1d8] sm:$0xff]
  %v90 = vld [vmem:[%s1 + $0x1e0] sm:$0xff]
  %v91 = vld [vmem:[%s1 + $0x1e8] sm:$0xff]
  %v92 = vld [vmem:[%s1 + $0x1f0] sm:$0xff]
  %v93 = vld [vmem:[%s1 + $0x1f8] sm:$0xff]
  %v94 = vld [vmem:[%s2] sm:$0x1]
  %v96 = vlaneseq
  %v97 = vshrl.u32 %v96, 7
  %v98 = vsub.s32 0, %v97
  %v99 = vrot.slane %v94, %v98
  %101 = vmatprep.subr.mxu0 0.0
  %102 = vmatpush1.msra.mxu0 %v30
  %103 = vmatprep.subr.mxu0 0.0
  %104 = vmatpush1.msra.mxu0 %v31
  %105 = vmatprep.subr.mxu0 0.0
  %106 = vmatpush1.msra.mxu0 %v32
  %107 = vmatprep.subr.mxu0 0.0
  %108 = vmatpush1.msra.mxu0 %v33
  %109 = vmatprep.subr.mxu0 0.0
  %110 = vmatpush1.msra.mxu0 %v34
  %111 = vmatprep.subr.mxu0 0.0
  %112 = vmatpush1.msra.mxu0 %v35
  %113 = vmatprep.subr.mxu0 0.0
  %114 = vmatpush1.msra.mxu0 %v36
  %115 = vmatprep.subr.mxu0 0.0
  %116 = vmatpush1.msra.mxu0 %v37
  %117 = vmatprep.subr.mxu0 0.0
  %118 = vmatpush1.msra.mxu0 %v38
  %119 = vmatprep.subr.mxu0 0.0
  %120 = vmatpush1.msra.mxu0 %v39
  %121 = vmatprep.subr.mxu0 0.0
  %122 = vmatpush1.msra.mxu0 %v40
  %123 = vmatprep.subr.mxu0 0.0
  %124 = vmatpush1.msra.mxu0 %v41
  %125 = vmatprep.subr.mxu0 0.0
  %126 = vmatpush1.msra.mxu0 %v42
  %127 = vmatprep.subr.mxu0 0.0
  %128 = vmatpush1.msra.mxu0 %v43
  %129 = vmatprep.subr.mxu0 0.0
  %130 = vmatpush1.msra.mxu0 %v44
  %131 = vmatprep.subr.mxu0 0.0
  %132 = vmatpush1.msra.mxu0 %v45
  %133 = vmatprep.subr.mxu0 0.0
  %134 = vmatpush1.msra.mxu0 %v46
  %135 = vmatprep.subr.mxu0 0.0
  %136 = vmatpush1.msra.mxu0 %v47
  %137 = vmatprep.subr.mxu0 0.0
  %138 = vmatpush1.msra.mxu0 %v48
  %139 = vmatprep.subr.mxu0 0.0
  %140 = vmatpush1.msra.mxu0 %v49
  %141 = vmatprep.subr.mxu0 0.0
  %142 = vmatpush1.msra.mxu0 %v50
  %143 = vmatprep.subr.mxu0 0.0
  %144 = vmatpush1.msra.mxu0 %v51
  %145 = vmatprep.subr.mxu0 0.0
  %146 = vmatpush1.msra.mxu0 %v52
  %147 = vmatprep.subr.mxu0 0.0
  %148 = vmatpush1.msra.mxu0 %v53
  %149 = vmatprep.subr.mxu0 0.0
  %150 = vmatpush1.msra.mxu0 %v54
  %151 = vmatprep.subr.mxu0 0.0
  %152 = vmatpush1.msra.mxu0 %v55
  %153 = vmatprep.subr.mxu0 0.0
  %154 = vmatpush1.msra.mxu0 %v56
  %155 = vmatprep.subr.mxu0 0.0
  %156 = vmatpush1.msra.mxu0 %v57
  %157 = vmatprep.subr.mxu0 0.0
  %158 = vmatpush1.msra.mxu0 %v58
  %159 = vmatprep.subr.mxu0 0.0
  %160 = vmatpush1.msra.mxu0 %v59
  %161 = vmatprep.subr.mxu0 0.0
  %162 = vmatpush1.msra.mxu0 %v60
  %163 = vmatprep.subr.mxu0 0.0
  %164 = vmatpush1.msra.mxu0 %v61
  %165 = vmatprep.mubr.f32.mxu0 %v15
  %166 = vmatmul.mubr.f32.gmra.mrb[0].mxu0 %v14
  %v167 = vpop.f32.mrb[0].mxu0
  %v168 = vadd.f32 %v99, %v167
  %v169 = vpop.f32.mrb[0].mxu0
  %170 = vmatprep.mubr.f32.mxu0 %v19
  %171 = vmatmul.mubr.f32.gmra.mrb[0].mxu0 %v18
  %v172 = vpop.f32.mrb[0].mxu0
  %v173 = vadd.f32 %v99, %v172
  %v174 = vpop.f32.mrb[0].mxu0
  %175 = vmatprep.mubr.f32.mxu0 %v23
  %176 = vmatmul.mubr.f32.gmra.mrb[0].mxu0 %v22
  %v177 = vpop.f32.mrb[0].mxu0
  %v178 = vadd.f32 %v99, %v177
  %v179 = vpop.f32.mrb[0].mxu0
  %180 = vmatprep.mubr.f32.mxu0 %v27
  %181 = vmatmul.mubr.f32.gmra.mrb[0].mxu0 %v26
  %v182 = vpop.f32.mrb[0].mxu0
  %v183 = vadd.f32 %v99, %v182
  %v184 = vpop.f32.mrb[0].mxu0
  %185 = vdwg.mxu0
  %186 = vmatprep.subr.mxu0 0.0
  %187 = vmatpush1.msra.mxu0 %v62
  %188 = vmatprep.subr.mxu0 0.0
  %189 = vmatpush1.msra.mxu0 %v63
  %190 = vmatprep.subr.mxu0 0.0
  %191 = vmatpush1.msra.mxu0 %v64
  %192 = vmatprep.subr.mxu0 0.0
  %193 = vmatpush1.msra.mxu0 %v65
  %194 = vmatprep.subr.mxu0 0.0
  %195 = vmatpush1.msra.mxu0 %v66
  %196 = vmatprep.subr.mxu0 0.0
  %197 = vmatpush1.msra.mxu0 %v67
  %198 = vmatprep.subr.mxu0 0.0
  %199 = vmatpush1.msra.mxu0 %v68
  %200 = vmatprep.subr.mxu0 0.0
  %201 = vmatpush1.msra.mxu0 %v69
  %202 = vmatprep.subr.mxu0 0.0
  %203 = vmatpush1.msra.mxu0 %v70
  %204 = vmatprep.subr.mxu0 0.0
  %205 = vmatpush1.msra.mxu0 %v71
  %206 = vmatprep.subr.mxu0 0.0
  %207 = vmatpush1.msra.mxu0 %v72
  %208 = vmatprep.subr.mxu0 0.0
  %209 = vmatpush1.msra.mxu0 %v73
  %210 = vmatprep.subr.mxu0 0.0
  %211 = vmatpush1.msra.mxu0 %v74
  %212 = vmatprep.subr.mxu0 0.0
  %213 = vmatpush1.msra.mxu0 %v75
  %214 = vmatprep.subr.mxu0 0.0
  %215 = vmatpush1.msra.mxu0 %v76
  %216 = vmatprep.subr.mxu0 0.0
  %217 = vmatpush1.msra.mxu0 %v77
  %218 = vmatprep.subr.mxu0 0.0
  %219 = vmatpush1.msra.mxu0 %v78
  %220 = vmatprep.subr.mxu0 0.0
  %221 = vmatpush1.msra.mxu0 %v79
  %222 = vmatprep.subr.mxu0 0.0
  %223 = vmatpush1.msra.mxu0 %v80
  %224 = vmatprep.subr.mxu0 0.0
  %225 = vmatpush1.msra.mxu0 %v81
  %226 = vmatprep.subr.mxu0 0.0
  %227 = vmatpush1.msra.mxu0 %v82
  %228 = vmatprep.subr.mxu0 0.0
  %229 = vmatpush1.msra.mxu0 %v83
  %230 = vmatprep.subr.mxu0 0.0
  %231 = vmatpush1.msra.mxu0 %v84
  %232 = vmatprep.subr.mxu0 0.0
  %233 = vmatpush1.msra.mxu0 %v85
  %234 = vmatprep.subr.mxu0 0.0
  %235 = vmatpush1.msra.mxu0 %v86
  %236 = vmatprep.subr.mxu0 0.0
  %237 = vmatpush1.msra.mxu0 %v87
  %238 = vmatprep.subr.mxu0 0.0
  %239 = vmatpush1.msra.mxu0 %v88
  %240 = vmatprep.subr.mxu0 0.0
  %241 = vmatpush1.msra.mxu0 %v89
  %242 = vmatprep.subr.mxu0 0.0
  %243 = vmatpush1.msra.mxu0 %v90
  %244 = vmatprep.subr.mxu0 0.0
  %245 = vmatpush1.msra.mxu0 %v91
  %246 = vmatprep.subr.mxu0 0.0
  %247 = vmatpush1.msra.mxu0 %v92
  %248 = vmatprep.subr.mxu0 0.0
  %249 = vmatpush1.msra.mxu0 %v93
  %250 = vmatprep.mubr.f32.mxu0 %v17
  %251 = vmatmul.mubr.f32.gmra.mrb[0].mxu0 %v16
  %v252 = vpop.f32.mrb[0].mxu0
  %v253 = vadd.f32 %v168, %v252
  %v254 = vpop.f32.mrb[0].mxu0
  %255 = vmatprep.mubr.f32.mxu0 %v21
  %256 = vmatmul.mubr.f32.gmra.mrb[0].mxu0 %v20
  %v257 = vpop.f32.mrb[0].mxu0
  %v258 = vadd.f32 %v173, %v257
  %v259 = vpop.f32.mrb[0].mxu0
  %260 = vmatprep.mubr.f32.mxu0 %v25
  %261 = vmatmul.mubr.f32.gmra.mrb[0].mxu0 %v24
  %v262 = vpop.f32.mrb[0].mxu0
  %v263 = vadd.f32 %v178, %v262
  %v264 = vpop.f32.mrb[0].mxu0
  %265 = vmatprep.mubr.f32.mxu0 %v29
  %266 = vmatmul.mubr.f32.gmra.mrb[0].mxu0 %v28
  %v267 = vpop.f32.mrb[0].mxu0
  %v268 = vadd.f32 %v183, %v267
  %v269 = vpop.f32.mrb[0].mxu0
  %270 = vdwg.mxu0
  %v271 = vmul.f32 %v253, 0.2
  %v272 = vmul.f32 %v258, 0.2
  %v273 = vmul.f32 %v263, 0.2
  %v274 = vmul.f32 %v268, 0.2
  %v275 = vmax.f32 %v253, %v271
  %v276 = vmax.f32 %v258, %v272
  %v277 = vmax.f32 %v263, %v273
  %v278 = vmax.f32 %v268, %v274
  %vm279 = vcmask 523264
  %280 = vst.msk [vmem:[%s3] sm:$0xff] %vm279, %v275
  %281 = vst.msk [vmem:[%s3 + $0x8] sm:$0xff] %vm279, %v276
  %282 = vst.msk [vmem:[%s3 + $0x10] sm:$0xff] %vm279, %v277
  %283 = vst.msk [vmem:[%s3 + $0x18] sm:$0xff] %vm279, %v278
  // Predicated region
  $region14: #{wgan_critic_forward.8} parent=0 // pred_check
    _
  $region15: #{wgan_critic_forward.8} parent=0 // pred_check_branch
    %285 = sbr.rel (0) target = $region17
  $region16: #{wgan_critic_forward.8} parent=0 // pred_region
    _
  $region17: #{wgan_critic_forward.8} parent=0 // pred_fallthru
    _
  // Predicated region
  $region18: #{wgan_critic_forward.8} parent=0 // pred_check
    _
  $region19: #{wgan_critic_forward.8} parent=0 // pred_check_branch
    %287 = sbr.rel (0) target = $region21
  $region20: #{wgan_critic_forward.8} parent=0 // pred_region
    _
  $region21: #{wgan_critic_forward.8} parent=0 // pred_fallthru
    _

// kernel: wgan_critic_forward.9
$region0: #{wgan_critic_forward.9}
  #allocation0 [shape = 'u32[]', space=smem, size = 0x4, offset = 0x4, fixed_abs, tag = 'smem constant byte address 0x4 - core index']
  #allocation1 [shape = 'u32[144,128]{1,0:T(1,128)}', space=vmem, size = 0x12000, scoped, tag = 'internal scratch']
  #allocation2 [shape = 'f32[1]{0:T(128)S(6)}', space=smem, size = 0x200, scoped, tag = 'scoped memory for wgan_critic_forward.9']
  %s0 = inlined_call_operand.vmem [shape: f32[2,1024], index: 0, kind: input, shape index: {}]
  %s1 = inlined_call_operand.vmem [shape: f32[1,1024], index: 1, kind: input, shape index: {}]
  %s2 = inlined_call_operand.<no memory space> [shape: f32[1], index: 2, kind: input, shape index: {}]
  %s3 = inlined_call_operand.vmem [shape: f32[2,1], index: 3, kind: output, shape index: {}]
  %s4 = sld [smem:[#allocation0]]
  $region22: #{wgan_critic_forward.9} parent=0
    _
  %s6 = ssub.s32 1, %s4
  %s7 = scalar_select 0, %s6, %s4
  %8 = sst [smem:[#allocation2]] %s2
  // Predicated region
  $region2: #{wgan_critic_forward.9} parent=0 // pred_check
    _
  $region3: #{wgan_critic_forward.9} parent=0 // pred_check_branch
    %10 = sbr.rel (0) target = $region5
  $region4: #{wgan_critic_forward.9} parent=0 // pred_region
    _
  $region5: #{wgan_critic_forward.9} parent=0 // pred_fallthru
    _
  // Predicated region
  $region6: #{wgan_critic_forward.9} parent=0 // pred_check
    _
  $region7: #{wgan_critic_forward.9} parent=0 // pred_check_branch
    %12 = sbr.rel (0) target = $region9
  $region8: #{wgan_critic_forward.9} parent=0 // pred_region
    _
  $region9: #{wgan_critic_forward.9} parent=0 // pred_fallthru
    _
  // Predicated region
  $region10: #{wgan_critic_forward.9} parent=0 // pred_check
    _
  $region11: #{wgan_critic_forward.9} parent=0 // pred_check_branch
    %14 = sbr.rel (0) target = $region13
  $region12: #{wgan_critic_forward.9} parent=0 // pred_region
    _
  $region13: #{wgan_critic_forward.9} parent=0 // pred_fallthru
    _
  %v15 = vld [vmem:[%s0] sm:$0xff]
  %v16 = vld [vmem:[%s0 + $0x8] sm:$0xff]
  %v17 = vld [vmem:[%s1] sm:$0xff]
  %v19 = vlaneseq
  %v20 = vshrl.u32 %v19, 7
  %v21 = vsub.s32 0, %v20
  %v22 = vrot.slane %v17, %v21
  %v23 = vlaneseq
  %v24 = vshrl.u32 %v23, 7
  %v25 = vsub.s32 1, %v24
  %v26 = vrot.slane %v17, %v25
  %v27 = vlaneseq
  %v28 = vshrl.u32 %v27, 7
  %v29 = vsub.s32 2, %v28
  %v30 = vrot.slane %v17, %v29
  %v31 = vlaneseq
  %v32 = vshrl.u32 %v31, 7
  %v33 = vsub.s32 3, %v32
  %v34 = vrot.slane %v17, %v33
  %v35 = vlaneseq
  %v36 = vshrl.u32 %v35, 7
  %v37 = vsub.s32 4, %v36
  %v38 = vrot.slane %v17, %v37
  %v39 = vlaneseq
  %v40 = vshrl.u32 %v39, 7
  %v41 = vsub.s32 5, %v40
  %v42 = vrot.slane %v17, %v41
  %v43 = vlaneseq
  %v44 = vshrl.u32 %v43, 7
  %v45 = vsub.s32 6, %v44
  %v46 = vrot.slane %v17, %v45
  %v47 = vlaneseq
  %v48 = vshrl.u32 %v47, 7
  %v49 = vsub.s32 7, %v48
  %v50 = vrot.slane %v17, %v49
  %v51 = vcombine.low %v22, %v26
  %v52 = vcombine.low %v30, %v34
  %v54 = vunpack.c.l.s4 1983009808
  %v55 = vunpack.c.0.s8 %v54
  %v56 = vlaneseq
  %v57 = vshrl.u32 %v56, 7
  %v58 = vsub.s32 %v55, %v57
  %v59 = vrot.slane %v51, %v58
  %v61 = vunpack.c.l.s4 1983009808
  %v62 = vunpack.c.0.s8 %v61
  %v63 = vlaneseq
  %v64 = vshrl.u32 %v63, 7
  %v65 = vsub.s32 %v62, %v64
  %v66 = vrot.slane %v52, %v65
  %v67 = vcombine.low %v59, %v66
  %v68 = vcombine.low %v38, %v42
  %v69 = vcombine.low %v46, %v50
  %v71 = vunpack.c.l.s4 1983009808
  %v72 = vunpack.c.0.s8 %v71
  %v73 = vlaneseq
  %v74 = vshrl.u32 %v73, 7
  %v75 = vsub.s32 %v72, %v74
  %v76 = vrot.slane %v68, %v75
  %v78 = vunpack.c.l.s4 1983009808
  %v79 = vunpack.c.0.s8 %v78
  %v80 = vlaneseq
  %v81 = vshrl.u32 %v80, 7
  %v82 = vsub.s32 %v79, %v81
  %v83 = vrot.slane %v69, %v82
  %v84 = vcombine.low %v76, %v83
  %v87 = vmul.f32 %v15, %v67
  %v88 = vmul.f32 %v16, %v84
  %v91 = vcombine.high %v87, %v87
  %v93 = vunpack.c.l.s4 1983009808
  %v94 = vunpack.c.0.s8 %v93
  %v95 = vlaneseq
  %v96 = vshrl.u32 %v95, 7
  %v97 = vsub.s32 %v94, %v96
  %v98 = vrot.slane %v87, %v97
  %v100 = vunpack.c.l.s4 1983009808
  %v101 = vunpack.c.0.s8 %v100
  %v102 = vlaneseq
  %v103 = vshrl.u32 %v102, 7
  %v104 = vsub.s32 %v101, %v103
  %v105 = vrot.slane %v91, %v104
  %v106 = vcombine.high %v98, %v98
  %v107 = vcombine.high %v105, %v105
  %v108 = vcombine.high %v88, %v88
  %v110 = vunpack.c.l.s4 1983009808
  %v111 = vunpack.c.0.s8 %v110
  %v112 = vlaneseq
  %v113 = vshrl.u32 %v112, 7
  %v114 = vsub.s32 %v111, %v113
  %v115 = vrot.slane %v88, %v114
  %v117 = vunpack.c.l.s4 1983009808
  %v118 = vunpack.c.0.s8 %v117
  %v119 = vlaneseq
  %v120 = vshrl.u32 %v119, 7
  %v121 = vsub.s32 %v118, %v120
  %v122 = vrot.slane %v108, %v121
  %v123 = vcombine.high %v115, %v115
  %v124 = vcombine.high %v122, %v122
  %vm133 = vcmask 1041408
  %v134 = vsel %vm133, %v98, 0.0
  %v135 = vsel %vm133, %v106, 0.0
  %v136 = vadd.f32 %v134, %v135
  %v137 = vsel %vm133, %v105, 0.0
  %v138 = vadd.f32 %v136, %v137
  %v139 = vsel %vm133, %v107, 0.0
  %v140 = vadd.f32 %v138, %v139
  %v141 = vsel %vm133, %v115, 0.0
  %v142 = vadd.f32 %v140, %v141
  %v143 = vsel %vm133, %v123, 0.0
  %v144 = vadd.f32 %v142, %v143
  %v145 = vsel %vm133, %v122, 0.0
  %v146 = vadd.f32 %v144, %v145
  %v147 = vsel %vm133, %v124, 0.0
  %v148 = vadd.f32 %v146, %v147
  %149 = vadd.xlane.f32.xlu0 %v148
  %v150 = vpop.xlane.xlu0 %149
  %s151 = sld [smem:[#allocation2]]
  %v152 = vstv %s151
  %v153 = vadd.f32 %v150, %v152
  %vm154 = vcmask 1024
  %155 = vst.msk [vmem:[%s3] sm:$0x3] %vm154, %v153
  // Predicated region
  $region14: #{wgan_critic_forward.9} parent=0 // pred_check
    _
  $region15: #{wgan_critic_forward.9} parent=0 // pred_check_branch
    %157 = sbr.rel (0) target = $region17
  $region16: #{wgan_critic_forward.9} parent=0 // pred_region
    _
  $region17: #{wgan_critic_forward.9} parent=0 // pred_fallthru
    _
  // Predicated region
  $region18: #{wgan_critic_forward.9} parent=0 // pred_check
    _
  $region19: #{wgan_critic_forward.9} parent=0 // pred_check_branch
    %159 = sbr.rel (0) target = $region21
  $region20: #{wgan_critic_forward.9} parent=0 // pred_region
    _
  $region21: #{wgan_critic_forward.9} parent=0 // pred_fallthru
    _

</llo_original>
